<compile_context>
chip_gen: v7x
topology: tpu7x:2x2x1
jax: 0.10.0
libtpu: 0.0.40
codegen_flags: <defaults>
</compile_context>

<pallas_src>
import jax
import jax.numpy as jnp
import numpy as np
from jax.experimental import pallas as pl
from jax.experimental.pallas import tpu as pltpu


# ------------------------------ fused multi-layer GRU kernel ------------------------------
# PyTorch GRU math, gate order (r, z, n):
#   r = sigmoid(x W_ir + b_ir + h W_hr + b_hr)
#   z = sigmoid(x W_iz + b_iz + h W_hz + b_hz)
#   n = tanh   (x W_in + b_in + r * (h W_hn + b_hn))
#   h' = (1 - z) * n + z * h
def make_fused_gru_kernel(num_layers, T, Bp, Epad, H, compute_dtype):
    G = 3 * H  # fused gate width, columns ordered [r | z | n]
    cdt = compute_dtype

    def kernel(*refs):
        x_ref = refs[0]                             # (T*Bp, Epad) time-major flat embeds
        w_refs = refs[1:1 + 4 * num_layers]         # per layer: wih, whh, bih, bhh
        out_ref = refs[1 + 4 * num_layers]          # (T*Bp, H)  time-major flat output
        gi_ref = refs[2 + 4 * num_layers]           # (T*Bp, 3H) reused input-projection buf
        seq_ref = refs[3 + 4 * num_layers] if num_layers > 1 else None  # (T*Bp, H)

        for l in range(num_layers):
            wih = w_refs[4 * l + 0][...]            # (D_l, 3H)  D_0 = Epad, else H
            whh = w_refs[4 * l + 1][...]            # (H, 3H)
            bih = w_refs[4 * l + 2][...]            # (1, 3H)  f32
            bhh = w_refs[4 * l + 3][...]            # (1, 3H)  f32
            bhh_b = jnp.broadcast_to(bhh, (Bp, G))  # hoisted out of the time loop

            src = x_ref if l == 0 else seq_ref
            dst = out_ref if l == num_layers - 1 else seq_ref

            # Hoisted, off-the-recurrence batched input projection for EVERY layer
            # (bias folded in). One wide MXU-friendly matmul per layer.
            gi_ref[...] = (
                jnp.dot(src[...].astype(cdt), wih, preferred_element_type=jnp.float32)
                + bih
            )

            def step(t, h, whh=whh, bhh_b=bhh_b, dst=dst):
                row = pl.multiple_of(t * Bp, Bp)                    # 8-sublane aligned
                gi = gi_ref[pl.ds(row, Bp), :]                      # (Bp, 3H), precomputed
                gh = jnp.dot(h.astype(cdt), whh,
                             preferred_element_type=jnp.float32) + bhh_b
                # One lane-aligned sigmoid over the fused [r|z] block.
                rz = jax.nn.sigmoid(gi[:, :2 * H] + gh[:, :2 * H])
                r = rz[:, :H]
                z = rz[:, H:]
                n = jnp.tanh(gi[:, 2 * H:] + r * gh[:, 2 * H:])
                h_new = (1.0 - z) * n + z * h
                dst[pl.ds(row, Bp), :] = h_new                      # aligned dynamic store
                return h_new

            h0 = jnp.zeros((Bp, H), jnp.float32)                    # h_0 = zeros, per layer
            jax.lax.fori_loop(0, T, step, h0, unroll=min(T, 8))     # bounded unroll

    return kernel


# --------------------------------------- wrapper ------------------------------------------
def glove_gru_encoder(txt_ids, txt_masks, word_embeds, params,
                      compute_dtype=jnp.float32):
    """txt_ids: (B, T) int32, word_embeds: (V, 300) f32.
    Returns (B, T, H) == PyTorch nn.GRU(batch_first=True) last_hidden_state."""
    del txt_masks  # unused in the reference forward pass (kept for API parity)
    B, T = txt_ids.shape
    E = word_embeds.shape[1]
    H = params[0][1].shape[0]
    L = len(params)
    G = 3 * H
    Bp = ((B + 7) // 8) * 8          # pad batch to a sublane multiple (aligned slabs)
    Epad = ((E + 127) // 128) * 128  # pad GloVe dim 300 -> 384 (lane multiple)

    # Pad GloVe columns with zeros (no numeric change) and the batch rows (sliced off).
    we = jnp.pad(word_embeds.astype(jnp.float32), ((0, 0), (0, Epad - E)))
    ids_p = jnp.pad(txt_ids, ((0, Bp - B), (0, 0)))
    # Gather directly in time-major flattened order: no (B,T,E)->(T,B,E) transpose pass.
    flat_ids = jnp.reshape(jnp.transpose(ids_p), (-1,))              # (T*Bp,)
    x2d = jnp.take(we, flat_ids, axis=0).astype(compute_dtype)       # (T*Bp, Epad)

    flat_w = []
    for l, (wih, whh, bih, bhh) in enumerate(params):
        if l == 0:
            wih = jnp.pad(wih, ((0, Epad - E), (0, 0)))              # zero-pad K rows
        flat_w += [wih.astype(compute_dtype), whh.astype(compute_dtype),
                   bih.astype(jnp.float32), bhh.astype(jnp.float32)]

    scratch = [pltpu.VMEM((T * Bp, G), jnp.float32)]                 # gi, reused per layer
    if L > 1:
        scratch.append(pltpu.VMEM((T * Bp, H), jnp.float32))         # inter-layer sequence

    # Explicit scoped-VMEM limit from the actual resident footprint (everything resident,
    # no double buffering in this gridless design).
    act_bytes = jnp.dtype(compute_dtype).itemsize
    resident = T * Bp * Epad * act_bytes                             # embeds
    resident += T * Bp * G * 4                                       # gi scratch
    resident += T * Bp * H * 4                                       # output
    if L > 1:
        resident += T * Bp * H * 4                                   # seq scratch
    for l in range(L):
        d_in = Epad if l == 0 else H
        resident += (d_in * G + H * G) * act_bytes + 2 * G * 4       # weights + biases
    vmem_limit = min(max(int(resident * 1.25) + (2 << 20), 32 << 20), 64 << 20)

    kernel = make_fused_gru_kernel(L, T, Bp, Epad, H, compute_dtype)
    vmem_spec = pl.BlockSpec(memory_space=pltpu.MemorySpace.VMEM)    # whole array, resident
    out2d = pl.pallas_call(
        kernel,
        out_shape=jax.ShapeDtypeStruct((T * Bp, H), jnp.float32),
        in_specs=[vmem_spec] * (1 + 4 * L),
        out_specs=vmem_spec,
        scratch_shapes=scratch,
        compiler_params=pltpu.CompilerParams(vmem_limit_bytes=vmem_limit),
    )(x2d, *flat_w)

    out = jnp.transpose(jnp.reshape(out2d, (T, Bp, H)), (1, 0, 2))   # (Bp, T, H)
    return out[:B]                                                   # drop padded batch rows


# ----------------------------- deterministic parameter init -------------------------------
def init_gru_params(key, input_size, hidden_size, num_layers):
    """Fused-layout params per layer: wih (D,3H), whh (H,3H), bih (1,3H), bhh (1,3H),
    gate blocks ordered [r | z | n] along the 3H axis (PyTorch order)."""
    params = []
    scale = 1.0 / np.sqrt(hidden_size)      # PyTorch default U(-1/sqrt(H), 1/sqrt(H))
    for layer in range(num_layers):
        d_in = input_size if layer == 0 else hidden_size
        key, k1, k2, k3, k4 = jax.random.split(key, 5)
        wih = jax.random.uniform(k1, (d_in, 3 * hidden_size), jnp.float32, -scale, scale)
        whh = jax.random.uniform(k2, (hidden_size, 3 * hidden_size), jnp.float32, -scale, scale)
        bih = jax.random.uniform(k3, (1, 3 * hidden_size), jnp.float32, -scale, scale)
        bhh = jax.random.uniform(k4, (1, 3 * hidden_size), jnp.float32, -scale, scale)
        params.append((wih, whh, bih, bhh))
    return params


# ---------------------------------- pure-JAX reference ------------------------------------
def gru_layer_ref(x_tbd, wih, whh, bih, bhh):
    B = x_tbd.shape[1]
    H = whh.shape[0]

    def step(h, x):
        gi = x @ wih + bih
        gh = h @ whh + bhh
        r = jax.nn.sigmoid(gi[:, 0:H] + gh[:, 0:H])
        z = jax.nn.sigmoid(gi[:, H:2 * H] + gh[:, H:2 * H])
        n = jnp.tanh(gi[:, 2 * H:] + r * gh[:, 2 * H:])
        h_new = (1.0 - z) * n + z * h
        return h_new, h_new

    h0 = jnp.zeros((B, H), jnp.float32)
    _, ys = jax.lax.scan(step, h0, x_tbd)
    return ys


def glove_gru_encoder_ref(txt_ids, word_embeds, params):
    x = jnp.transpose(word_embeds[txt_ids], (1, 0, 2)).astype(jnp.float32)  # (T, B, E)
    for (wih, whh, bih, bhh) in params:
        x = gru_layer_ref(x, wih, whh, bih, bhh)
    return jnp.transpose(x, (1, 0, 2))                                      # (B, T, H)


# ------------------------------------------ main ------------------------------------------
if __name__ == "__main__":
    B, T, V, E, H, L = 2, 8, 50, 300, 32, 2   # batch, seq, vocab, glove dim, hidden, layers

    key = jax.random.PRNGKey(0)
    k_ids, k_emb, k_par = jax.random.split(key, 3)

    # Synthetic deterministic "GloVe" table instead of the .npy buffer.
    word_embeds = jax.random.normal(k_emb, (V, E), dtype=jnp.float32)
    txt_ids = jax.random.randint(k_ids, (B, T), 0, V, dtype=jnp.int32)
    txt_masks = jnp.ones((B, T), dtype=jnp.float32)   # unused, matching the module

    params = init_gru_params(k_par, E, H, L)

    run = jax.jit(glove_gru_encoder)
    out = run(txt_ids, txt_masks, word_embeds, params)
    out = jax.block_until_ready(out)
    assert out.shape == (B, T, H)

    ref = glove_gru_encoder_ref(txt_ids, word_embeds, params)
    np.testing.assert_allclose(np.asarray(out), np.asarray(ref), atol=1e-4, rtol=1e-4)

    print("KERNEL_OK")
</pallas_src>

<mosaic_0001>
module attributes {stable_mosaic.version = 11 : i64} {
  func.func @kernel(%arg0: memref<64x384xf32, #tpu.memory_space<vmem>>, %arg1: memref<384x96xf32, #tpu.memory_space<vmem>>, %arg2: memref<32x96xf32, #tpu.memory_space<vmem>>, %arg3: memref<1x96xf32, #tpu.memory_space<vmem>>, %arg4: memref<1x96xf32, #tpu.memory_space<vmem>>, %arg5: memref<32x96xf32, #tpu.memory_space<vmem>>, %arg6: memref<32x96xf32, #tpu.memory_space<vmem>>, %arg7: memref<1x96xf32, #tpu.memory_space<vmem>>, %arg8: memref<1x96xf32, #tpu.memory_space<vmem>>, %arg9: memref<64x32xf32, #tpu.memory_space<vmem>>, %arg10: memref<64x96xf32, #tpu.memory_space<vmem>>, %arg11: memref<64x32xf32, #tpu.memory_space<vmem>>) attributes {dimension_semantics = [], scalar_prefetch = 0 : i64, scratch_operands = 2 : i64, tpu.core_type = #tpu.core_type<tc>} {
    %c0 = arith.constant 0 : index
    %c0_0 = arith.constant 0 : index
    %0 = vector.load %arg1[%c0, %c0_0] : memref<384x96xf32, #tpu.memory_space<vmem>>, vector<384x96xf32>
    %c0_1 = arith.constant 0 : index
    %c0_2 = arith.constant 0 : index
    %1 = vector.load %arg2[%c0_1, %c0_2] : memref<32x96xf32, #tpu.memory_space<vmem>>, vector<32x96xf32>
    %c0_3 = arith.constant 0 : index
    %c0_4 = arith.constant 0 : index
    %2 = vector.load %arg3[%c0_3, %c0_4] : memref<1x96xf32, #tpu.memory_space<vmem>>, vector<1x96xf32>
    %c0_5 = arith.constant 0 : index
    %c0_6 = arith.constant 0 : index
    %3 = vector.load %arg4[%c0_5, %c0_6] : memref<1x96xf32, #tpu.memory_space<vmem>>, vector<1x96xf32>
    %4 = vector.shape_cast %3 : vector<1x96xf32> to vector<1x96xf32>
    %5 = vector.broadcast %4 : vector<1x96xf32> to vector<8x96xf32>
    %c0_7 = arith.constant 0 : index
    %c0_8 = arith.constant 0 : index
    %6 = vector.load %arg0[%c0_7, %c0_8] : memref<64x384xf32, #tpu.memory_space<vmem>>, vector<64x384xf32>
    %cst = arith.constant dense<0.000000e+00> : vector<64x96xf32>
    %7 = tpu.matmul %6, %0, %cst {dimension_numbers = #tpu.dot_dimension_numbers<[1], [0], [0], [1], [0, 0, 1, 1], [], []>} : vector<64x384xf32>, vector<384x96xf32>, vector<64x96xf32> -> vector<64x96xf32>
    %8 = vector.broadcast %2 : vector<1x96xf32> to vector<64x96xf32>
    %9 = arith.addf %7, %8 : vector<64x96xf32>
    %c0_9 = arith.constant 0 : index
    %c0_10 = arith.constant 0 : index
    %10 = vector.load %arg10[%c0_9, %c0_10] : memref<64x96xf32, #tpu.memory_space<vmem>>, vector<64x96xf32>
    tpu.vector_store %arg10[%c0_9, %c0_10], %9 {strides = array<i32>} : memref<64x96xf32, #tpu.memory_space<vmem>>, vector<64x96xf32>,
    %cst_11 = arith.constant 0.000000e+00 : f32
    %11 = vector.broadcast %cst_11 : f32 to vector<8x32xf32>
    %c0_i32 = arith.constant 0 : i32
    %c8_i32 = arith.constant 8 : i32
    %12 = arith.muli %c0_i32, %c8_i32 : i32
    %13 = tpu.assume_multiple %12, 8 : i32
    %14 = arith.index_cast %13 : i32 to index
    %c0_12 = arith.constant 0 : index
    %15 = vector.load %arg10[%14, %c0_12] : memref<64x96xf32, #tpu.memory_space<vmem>>, vector<8x96xf32>
    %cst_13 = arith.constant dense<0.000000e+00> : vector<8x96xf32>
    %16 = tpu.matmul %11, %1, %cst_13 {dimension_numbers = #tpu.dot_dimension_numbers<[1], [0], [0], [1], [0, 0, 1, 1], [], []>} : vector<8x32xf32>, vector<32x96xf32>, vector<8x96xf32> -> vector<8x96xf32>
    %17 = arith.addf %16, %5 : vector<8x96xf32>
    %18 = vector.extract_strided_slice %15 {offsets = [0, 0], sizes = [8, 64], strides = [1, 1]} : vector<8x96xf32> to vector<8x64xf32>
    %19 = vector.extract_strided_slice %17 {offsets = [0, 0], sizes = [8, 64], strides = [1, 1]} : vector<8x96xf32> to vector<8x64xf32>
    %20 = arith.addf %18, %19 : vector<8x64xf32>
    %21 = arith.negf %20 : vector<8x64xf32>
    %22 = math.exp %21 : vector<8x64xf32>
    %cst_14 = arith.constant 1.000000e+00 : f32
    %23 = vector.broadcast %cst_14 : f32 to vector<8x64xf32>
    %24 = arith.addf %23, %22 : vector<8x64xf32>
    %25 = arith.divf %23, %24 : vector<8x64xf32>
    %26 = vector.extract_strided_slice %25 {offsets = [0, 0], sizes = [8, 32], strides = [1, 1]} : vector<8x64xf32> to vector<8x32xf32>
    %27 = vector.extract_strided_slice %25 {offsets = [0, 32], sizes = [8, 32], strides = [1, 1]} : vector<8x64xf32> to vector<8x32xf32>
    %28 = vector.extract_strided_slice %15 {offsets = [0, 64], sizes = [8, 32], strides = [1, 1]} : vector<8x96xf32> to vector<8x32xf32>
    %29 = vector.extract_strided_slice %17 {offsets = [0, 64], sizes = [8, 32], strides = [1, 1]} : vector<8x96xf32> to vector<8x32xf32>
    %30 = arith.mulf %26, %29 : vector<8x32xf32>
    %31 = arith.addf %28, %30 : vector<8x32xf32>
    %32 = math.tanh %31 : vector<8x32xf32>
    %cst_15 = arith.constant 1.000000e+00 : f32
    %33 = vector.broadcast %cst_15 : f32 to vector<8x32xf32>
    %34 = arith.subf %33, %27 : vector<8x32xf32>
    %35 = arith.mulf %34, %32 : vector<8x32xf32>
    %36 = arith.mulf %27, %11 : vector<8x32xf32>
    %37 = arith.addf %35, %36 : vector<8x32xf32>
    %38 = arith.index_cast %13 : i32 to index
    %c0_16 = arith.constant 0 : index
    %39 = vector.load %arg11[%38, %c0_16] : memref<64x32xf32, #tpu.memory_space<vmem>>, vector<8x32xf32>
    tpu.vector_store %arg11[%38, %c0_16], %37 {strides = array<i32>} : memref<64x32xf32, #tpu.memory_space<vmem>>, vector<8x32xf32>,
    %c1_i32 = arith.constant 1 : i32
    %c8_i32_17 = arith.constant 8 : i32
    %40 = arith.muli %c1_i32, %c8_i32_17 : i32
    %41 = tpu.assume_multiple %40, 8 : i32
    %42 = arith.index_cast %41 : i32 to index
    %c0_18 = arith.constant 0 : index
    %43 = vector.load %arg10[%42, %c0_18] : memref<64x96xf32, #tpu.memory_space<vmem>>, vector<8x96xf32>
    %cst_19 = arith.constant dense<0.000000e+00> : vector<8x96xf32>
    %44 = tpu.matmul %37, %1, %cst_19 {dimension_numbers = #tpu.dot_dimension_numbers<[1], [0], [0], [1], [0, 0, 1, 1], [], []>} : vector<8x32xf32>, vector<32x96xf32>, vector<8x96xf32> -> vector<8x96xf32>
    %45 = arith.addf %44, %5 : vector<8x96xf32>
    %46 = vector.extract_strided_slice %43 {offsets = [0, 0], sizes = [8, 64], strides = [1, 1]} : vector<8x96xf32> to vector<8x64xf32>
    %47 = vector.extract_strided_slice %45 {offsets = [0, 0], sizes = [8, 64], strides = [1, 1]} : vector<8x96xf32> to vector<8x64xf32>
    %48 = arith.addf %46, %47 : vector<8x64xf32>
    %49 = arith.negf %48 : vector<8x64xf32>
    %50 = math.exp %49 : vector<8x64xf32>
    %cst_20 = arith.constant 1.000000e+00 : f32
    %51 = vector.broadcast %cst_20 : f32 to vector<8x64xf32>
    %52 = arith.addf %51, %50 : vector<8x64xf32>
    %53 = arith.divf %51, %52 : vector<8x64xf32>
    %54 = vector.extract_strided_slice %53 {offsets = [0, 0], sizes = [8, 32], strides = [1, 1]} : vector<8x64xf32> to vector<8x32xf32>
    %55 = vector.extract_strided_slice %53 {offsets = [0, 32], sizes = [8, 32], strides = [1, 1]} : vector<8x64xf32> to vector<8x32xf32>
    %56 = vector.extract_strided_slice %43 {offsets = [0, 64], sizes = [8, 32], strides = [1, 1]} : vector<8x96xf32> to vector<8x32xf32>
    %57 = vector.extract_strided_slice %45 {offsets = [0, 64], sizes = [8, 32], strides = [1, 1]} : vector<8x96xf32> to vector<8x32xf32>
    %58 = arith.mulf %54, %57 : vector<8x32xf32>
    %59 = arith.addf %56, %58 : vector<8x32xf32>
    %60 = math.tanh %59 : vector<8x32xf32>
    %cst_21 = arith.constant 1.000000e+00 : f32
    %61 = vector.broadcast %cst_21 : f32 to vector<8x32xf32>
    %62 = arith.subf %61, %55 : vector<8x32xf32>
    %63 = arith.mulf %62, %60 : vector<8x32xf32>
    %64 = arith.mulf %55, %37 : vector<8x32xf32>
    %65 = arith.addf %63, %64 : vector<8x32xf32>
    %66 = arith.index_cast %41 : i32 to index
    %c0_22 = arith.constant 0 : index
    %67 = vector.load %arg11[%66, %c0_22] : memref<64x32xf32, #tpu.memory_space<vmem>>, vector<8x32xf32>
    tpu.vector_store %arg11[%66, %c0_22], %65 {strides = array<i32>} : memref<64x32xf32, #tpu.memory_space<vmem>>, vector<8x32xf32>,
    %c2_i32 = arith.constant 2 : i32
    %c8_i32_23 = arith.constant 8 : i32
    %68 = arith.muli %c2_i32, %c8_i32_23 : i32
    %69 = tpu.assume_multiple %68, 8 : i32
    %70 = arith.index_cast %69 : i32 to index
    %c0_24 = arith.constant 0 : index
    %71 = vector.load %arg10[%70, %c0_24] : memref<64x96xf32, #tpu.memory_space<vmem>>, vector<8x96xf32>
    %cst_25 = arith.constant dense<0.000000e+00> : vector<8x96xf32>
    %72 = tpu.matmul %65, %1, %cst_25 {dimension_numbers = #tpu.dot_dimension_numbers<[1], [0], [0], [1], [0, 0, 1, 1], [], []>} : vector<8x32xf32>, vector<32x96xf32>, vector<8x96xf32> -> vector<8x96xf32>
    %73 = arith.addf %72, %5 : vector<8x96xf32>
    %74 = vector.extract_strided_slice %71 {offsets = [0, 0], sizes = [8, 64], strides = [1, 1]} : vector<8x96xf32> to vector<8x64xf32>
    %75 = vector.extract_strided_slice %73 {offsets = [0, 0], sizes = [8, 64], strides = [1, 1]} : vector<8x96xf32> to vector<8x64xf32>
    %76 = arith.addf %74, %75 : vector<8x64xf32>
    %77 = arith.negf %76 : vector<8x64xf32>
    %78 = math.exp %77 : vector<8x64xf32>
    %cst_26 = arith.constant 1.000000e+00 : f32
    %79 = vector.broadcast %cst_26 : f32 to vector<8x64xf32>
    %80 = arith.addf %79, %78 : vector<8x64xf32>
    %81 = arith.divf %79, %80 : vector<8x64xf32>
    %82 = vector.extract_strided_slice %81 {offsets = [0, 0], sizes = [8, 32], strides = [1, 1]} : vector<8x64xf32> to vector<8x32xf32>
    %83 = vector.extract_strided_slice %81 {offsets = [0, 32], sizes = [8, 32], strides = [1, 1]} : vector<8x64xf32> to vector<8x32xf32>
    %84 = vector.extract_strided_slice %71 {offsets = [0, 64], sizes = [8, 32], strides = [1, 1]} : vector<8x96xf32> to vector<8x32xf32>
    %85 = vector.extract_strided_slice %73 {offsets = [0, 64], sizes = [8, 32], strides = [1, 1]} : vector<8x96xf32> to vector<8x32xf32>
    %86 = arith.mulf %82, %85 : vector<8x32xf32>
    %87 = arith.addf %84, %86 : vector<8x32xf32>
    %88 = math.tanh %87 : vector<8x32xf32>
    %cst_27 = arith.constant 1.000000e+00 : f32
    %89 = vector.broadcast %cst_27 : f32 to vector<8x32xf32>
    %90 = arith.subf %89, %83 : vector<8x32xf32>
    %91 = arith.mulf %90, %88 : vector<8x32xf32>
    %92 = arith.mulf %83, %65 : vector<8x32xf32>
    %93 = arith.addf %91, %92 : vector<8x32xf32>
    %94 = arith.index_cast %69 : i32 to index
    %c0_28 = arith.constant 0 : index
    %95 = vector.load %arg11[%94, %c0_28] : memref<64x32xf32, #tpu.memory_space<vmem>>, vector<8x32xf32>
    tpu.vector_store %arg11[%94, %c0_28], %93 {strides = array<i32>} : memref<64x32xf32, #tpu.memory_space<vmem>>, vector<8x32xf32>,
    %c3_i32 = arith.constant 3 : i32
    %c8_i32_29 = arith.constant 8 : i32
    %96 = arith.muli %c3_i32, %c8_i32_29 : i32
    %97 = tpu.assume_multiple %96, 8 : i32
    %98 = arith.index_cast %97 : i32 to index
    %c0_30 = arith.constant 0 : index
    %99 = vector.load %arg10[%98, %c0_30] : memref<64x96xf32, #tpu.memory_space<vmem>>, vector<8x96xf32>
    %cst_31 = arith.constant dense<0.000000e+00> : vector<8x96xf32>
    %100 = tpu.matmul %93, %1, %cst_31 {dimension_numbers = #tpu.dot_dimension_numbers<[1], [0], [0], [1], [0, 0, 1, 1], [], []>} : vector<8x32xf32>, vector<32x96xf32>, vector<8x96xf32> -> vector<8x96xf32>
    %101 = arith.addf %100, %5 : vector<8x96xf32>
    %102 = vector.extract_strided_slice %99 {offsets = [0, 0], sizes = [8, 64], strides = [1, 1]} : vector<8x96xf32> to vector<8x64xf32>
    %103 = vector.extract_strided_slice %101 {offsets = [0, 0], sizes = [8, 64], strides = [1, 1]} : vector<8x96xf32> to vector<8x64xf32>
    %104 = arith.addf %102, %103 : vector<8x64xf32>
    %105 = arith.negf %104 : vector<8x64xf32>
    %106 = math.exp %105 : vector<8x64xf32>
    %cst_32 = arith.constant 1.000000e+00 : f32
    %107 = vector.broadcast %cst_32 : f32 to vector<8x64xf32>
    %108 = arith.addf %107, %106 : vector<8x64xf32>
    %109 = arith.divf %107, %108 : vector<8x64xf32>
    %110 = vector.extract_strided_slice %109 {offsets = [0, 0], sizes = [8, 32], strides = [1, 1]} : vector<8x64xf32> to vector<8x32xf32>
    %111 = vector.extract_strided_slice %109 {offsets = [0, 32], sizes = [8, 32], strides = [1, 1]} : vector<8x64xf32> to vector<8x32xf32>
    %112 = vector.extract_strided_slice %99 {offsets = [0, 64], sizes = [8, 32], strides = [1, 1]} : vector<8x96xf32> to vector<8x32xf32>
    %113 = vector.extract_strided_slice %101 {offsets = [0, 64], sizes = [8, 32], strides = [1, 1]} : vector<8x96xf32> to vector<8x32xf32>
    %114 = arith.mulf %110, %113 : vector<8x32xf32>
    %115 = arith.addf %112, %114 : vector<8x32xf32>
    %116 = math.tanh %115 : vector<8x32xf32>
    %cst_33 = arith.constant 1.000000e+00 : f32
    %117 = vector.broadcast %cst_33 : f32 to vector<8x32xf32>
    %118 = arith.subf %117, %111 : vector<8x32xf32>
    %119 = arith.mulf %118, %116 : vector<8x32xf32>
    %120 = arith.mulf %111, %93 : vector<8x32xf32>
    %121 = arith.addf %119, %120 : vector<8x32xf32>
    %122 = arith.index_cast %97 : i32 to index
    %c0_34 = arith.constant 0 : index
    %123 = vector.load %arg11[%122, %c0_34] : memref<64x32xf32, #tpu.memory_space<vmem>>, vector<8x32xf32>
    tpu.vector_store %arg11[%122, %c0_34], %121 {strides = array<i32>} : memref<64x32xf32, #tpu.memory_space<vmem>>, vector<8x32xf32>,
    %c4_i32 = arith.constant 4 : i32
    %c8_i32_35 = arith.constant 8 : i32
    %124 = arith.muli %c4_i32, %c8_i32_35 : i32
    %125 = tpu.assume_multiple %124, 8 : i32
    %126 = arith.index_cast %125 : i32 to index
    %c0_36 = arith.constant 0 : index
    %127 = vector.load %arg10[%126, %c0_36] : memref<64x96xf32, #tpu.memory_space<vmem>>, vector<8x96xf32>
    %cst_37 = arith.constant dense<0.000000e+00> : vector<8x96xf32>
    %128 = tpu.matmul %121, %1, %cst_37 {dimension_numbers = #tpu.dot_dimension_numbers<[1], [0], [0], [1], [0, 0, 1, 1], [], []>} : vector<8x32xf32>, vector<32x96xf32>, vector<8x96xf32> -> vector<8x96xf32>
    %129 = arith.addf %128, %5 : vector<8x96xf32>
    %130 = vector.extract_strided_slice %127 {offsets = [0, 0], sizes = [8, 64], strides = [1, 1]} : vector<8x96xf32> to vector<8x64xf32>
    %131 = vector.extract_strided_slice %129 {offsets = [0, 0], sizes = [8, 64], strides = [1, 1]} : vector<8x96xf32> to vector<8x64xf32>
    %132 = arith.addf %130, %131 : vector<8x64xf32>
    %133 = arith.negf %132 : vector<8x64xf32>
    %134 = math.exp %133 : vector<8x64xf32>
    %cst_38 = arith.constant 1.000000e+00 : f32
    %135 = vector.broadcast %cst_38 : f32 to vector<8x64xf32>
    %136 = arith.addf %135, %134 : vector<8x64xf32>
    %137 = arith.divf %135, %136 : vector<8x64xf32>
    %138 = vector.extract_strided_slice %137 {offsets = [0, 0], sizes = [8, 32], strides = [1, 1]} : vector<8x64xf32> to vector<8x32xf32>
    %139 = vector.extract_strided_slice %137 {offsets = [0, 32], sizes = [8, 32], strides = [1, 1]} : vector<8x64xf32> to vector<8x32xf32>
    %140 = vector.extract_strided_slice %127 {offsets = [0, 64], sizes = [8, 32], strides = [1, 1]} : vector<8x96xf32> to vector<8x32xf32>
    %141 = vector.extract_strided_slice %129 {offsets = [0, 64], sizes = [8, 32], strides = [1, 1]} : vector<8x96xf32> to vector<8x32xf32>
    %142 = arith.mulf %138, %141 : vector<8x32xf32>
    %143 = arith.addf %140, %142 : vector<8x32xf32>
    %144 = math.tanh %143 : vector<8x32xf32>
    %cst_39 = arith.constant 1.000000e+00 : f32
    %145 = vector.broadcast %cst_39 : f32 to vector<8x32xf32>
    %146 = arith.subf %145, %139 : vector<8x32xf32>
    %147 = arith.mulf %146, %144 : vector<8x32xf32>
    %148 = arith.mulf %139, %121 : vector<8x32xf32>
    %149 = arith.addf %147, %148 : vector<8x32xf32>
    %150 = arith.index_cast %125 : i32 to index
    %c0_40 = arith.constant 0 : index
    %151 = vector.load %arg11[%150, %c0_40] : memref<64x32xf32, #tpu.memory_space<vmem>>, vector<8x32xf32>
    tpu.vector_store %arg11[%150, %c0_40], %149 {strides = array<i32>} : memref<64x32xf32, #tpu.memory_space<vmem>>, vector<8x32xf32>,
    %c5_i32 = arith.constant 5 : i32
    %c8_i32_41 = arith.constant 8 : i32
    %152 = arith.muli %c5_i32, %c8_i32_41 : i32
    %153 = tpu.assume_multiple %152, 8 : i32
    %154 = arith.index_cast %153 : i32 to index
    %c0_42 = arith.constant 0 : index
    %155 = vector.load %arg10[%154, %c0_42] : memref<64x96xf32, #tpu.memory_space<vmem>>, vector<8x96xf32>
    %cst_43 = arith.constant dense<0.000000e+00> : vector<8x96xf32>
    %156 = tpu.matmul %149, %1, %cst_43 {dimension_numbers = #tpu.dot_dimension_numbers<[1], [0], [0], [1], [0, 0, 1, 1], [], []>} : vector<8x32xf32>, vector<32x96xf32>, vector<8x96xf32> -> vector<8x96xf32>
    %157 = arith.addf %156, %5 : vector<8x96xf32>
    %158 = vector.extract_strided_slice %155 {offsets = [0, 0], sizes = [8, 64], strides = [1, 1]} : vector<8x96xf32> to vector<8x64xf32>
    %159 = vector.extract_strided_slice %157 {offsets = [0, 0], sizes = [8, 64], strides = [1, 1]} : vector<8x96xf32> to vector<8x64xf32>
    %160 = arith.addf %158, %159 : vector<8x64xf32>
    %161 = arith.negf %160 : vector<8x64xf32>
    %162 = math.exp %161 : vector<8x64xf32>
    %cst_44 = arith.constant 1.000000e+00 : f32
    %163 = vector.broadcast %cst_44 : f32 to vector<8x64xf32>
    %164 = arith.addf %163, %162 : vector<8x64xf32>
    %165 = arith.divf %163, %164 : vector<8x64xf32>
    %166 = vector.extract_strided_slice %165 {offsets = [0, 0], sizes = [8, 32], strides = [1, 1]} : vector<8x64xf32> to vector<8x32xf32>
    %167 = vector.extract_strided_slice %165 {offsets = [0, 32], sizes = [8, 32], strides = [1, 1]} : vector<8x64xf32> to vector<8x32xf32>
    %168 = vector.extract_strided_slice %155 {offsets = [0, 64], sizes = [8, 32], strides = [1, 1]} : vector<8x96xf32> to vector<8x32xf32>
    %169 = vector.extract_strided_slice %157 {offsets = [0, 64], sizes = [8, 32], strides = [1, 1]} : vector<8x96xf32> to vector<8x32xf32>
    %170 = arith.mulf %166, %169 : vector<8x32xf32>
    %171 = arith.addf %168, %170 : vector<8x32xf32>
    %172 = math.tanh %171 : vector<8x32xf32>
    %cst_45 = arith.constant 1.000000e+00 : f32
    %173 = vector.broadcast %cst_45 : f32 to vector<8x32xf32>
    %174 = arith.subf %173, %167 : vector<8x32xf32>
    %175 = arith.mulf %174, %172 : vector<8x32xf32>
    %176 = arith.mulf %167, %149 : vector<8x32xf32>
    %177 = arith.addf %175, %176 : vector<8x32xf32>
    %178 = arith.index_cast %153 : i32 to index
    %c0_46 = arith.constant 0 : index
    %179 = vector.load %arg11[%178, %c0_46] : memref<64x32xf32, #tpu.memory_space<vmem>>, vector<8x32xf32>
    tpu.vector_store %arg11[%178, %c0_46], %177 {strides = array<i32>} : memref<64x32xf32, #tpu.memory_space<vmem>>, vector<8x32xf32>,
    %c6_i32 = arith.constant 6 : i32
    %c8_i32_47 = arith.constant 8 : i32
    %180 = arith.muli %c6_i32, %c8_i32_47 : i32
    %181 = tpu.assume_multiple %180, 8 : i32
    %182 = arith.index_cast %181 : i32 to index
    %c0_48 = arith.constant 0 : index
    %183 = vector.load %arg10[%182, %c0_48] : memref<64x96xf32, #tpu.memory_space<vmem>>, vector<8x96xf32>
    %cst_49 = arith.constant dense<0.000000e+00> : vector<8x96xf32>
    %184 = tpu.matmul %177, %1, %cst_49 {dimension_numbers = #tpu.dot_dimension_numbers<[1], [0], [0], [1], [0, 0, 1, 1], [], []>} : vector<8x32xf32>, vector<32x96xf32>, vector<8x96xf32> -> vector<8x96xf32>
    %185 = arith.addf %184, %5 : vector<8x96xf32>
    %186 = vector.extract_strided_slice %183 {offsets = [0, 0], sizes = [8, 64], strides = [1, 1]} : vector<8x96xf32> to vector<8x64xf32>
    %187 = vector.extract_strided_slice %185 {offsets = [0, 0], sizes = [8, 64], strides = [1, 1]} : vector<8x96xf32> to vector<8x64xf32>
    %188 = arith.addf %186, %187 : vector<8x64xf32>
    %189 = arith.negf %188 : vector<8x64xf32>
    %190 = math.exp %189 : vector<8x64xf32>
    %cst_50 = arith.constant 1.000000e+00 : f32
    %191 = vector.broadcast %cst_50 : f32 to vector<8x64xf32>
    %192 = arith.addf %191, %190 : vector<8x64xf32>
    %193 = arith.divf %191, %192 : vector<8x64xf32>
    %194 = vector.extract_strided_slice %193 {offsets = [0, 0], sizes = [8, 32], strides = [1, 1]} : vector<8x64xf32> to vector<8x32xf32>
    %195 = vector.extract_strided_slice %193 {offsets = [0, 32], sizes = [8, 32], strides = [1, 1]} : vector<8x64xf32> to vector<8x32xf32>
    %196 = vector.extract_strided_slice %183 {offsets = [0, 64], sizes = [8, 32], strides = [1, 1]} : vector<8x96xf32> to vector<8x32xf32>
    %197 = vector.extract_strided_slice %185 {offsets = [0, 64], sizes = [8, 32], strides = [1, 1]} : vector<8x96xf32> to vector<8x32xf32>
    %198 = arith.mulf %194, %197 : vector<8x32xf32>
    %199 = arith.addf %196, %198 : vector<8x32xf32>
    %200 = math.tanh %199 : vector<8x32xf32>
    %cst_51 = arith.constant 1.000000e+00 : f32
    %201 = vector.broadcast %cst_51 : f32 to vector<8x32xf32>
    %202 = arith.subf %201, %195 : vector<8x32xf32>
    %203 = arith.mulf %202, %200 : vector<8x32xf32>
    %204 = arith.mulf %195, %177 : vector<8x32xf32>
    %205 = arith.addf %203, %204 : vector<8x32xf32>
    %206 = arith.index_cast %181 : i32 to index
    %c0_52 = arith.constant 0 : index
    %207 = vector.load %arg11[%206, %c0_52] : memref<64x32xf32, #tpu.memory_space<vmem>>, vector<8x32xf32>
    tpu.vector_store %arg11[%206, %c0_52], %205 {strides = array<i32>} : memref<64x32xf32, #tpu.memory_space<vmem>>, vector<8x32xf32>,
    %c7_i32 = arith.constant 7 : i32
    %c8_i32_53 = arith.constant 8 : i32
    %208 = arith.muli %c7_i32, %c8_i32_53 : i32
    %209 = tpu.assume_multiple %208, 8 : i32
    %210 = arith.index_cast %209 : i32 to index
    %c0_54 = arith.constant 0 : index
    %211 = vector.load %arg10[%210, %c0_54] : memref<64x96xf32, #tpu.memory_space<vmem>>, vector<8x96xf32>
    %cst_55 = arith.constant dense<0.000000e+00> : vector<8x96xf32>
    %212 = tpu.matmul %205, %1, %cst_55 {dimension_numbers = #tpu.dot_dimension_numbers<[1], [0], [0], [1], [0, 0, 1, 1], [], []>} : vector<8x32xf32>, vector<32x96xf32>, vector<8x96xf32> -> vector<8x96xf32>
    %213 = arith.addf %212, %5 : vector<8x96xf32>
    %214 = vector.extract_strided_slice %211 {offsets = [0, 0], sizes = [8, 64], strides = [1, 1]} : vector<8x96xf32> to vector<8x64xf32>
    %215 = vector.extract_strided_slice %213 {offsets = [0, 0], sizes = [8, 64], strides = [1, 1]} : vector<8x96xf32> to vector<8x64xf32>
    %216 = arith.addf %214, %215 : vector<8x64xf32>
    %217 = arith.negf %216 : vector<8x64xf32>
    %218 = math.exp %217 : vector<8x64xf32>
    %cst_56 = arith.constant 1.000000e+00 : f32
    %219 = vector.broadcast %cst_56 : f32 to vector<8x64xf32>
    %220 = arith.addf %219, %218 : vector<8x64xf32>
    %221 = arith.divf %219, %220 : vector<8x64xf32>
    %222 = vector.extract_strided_slice %221 {offsets = [0, 0], sizes = [8, 32], strides = [1, 1]} : vector<8x64xf32> to vector<8x32xf32>
    %223 = vector.extract_strided_slice %221 {offsets = [0, 32], sizes = [8, 32], strides = [1, 1]} : vector<8x64xf32> to vector<8x32xf32>
    %224 = vector.extract_strided_slice %211 {offsets = [0, 64], sizes = [8, 32], strides = [1, 1]} : vector<8x96xf32> to vector<8x32xf32>
    %225 = vector.extract_strided_slice %213 {offsets = [0, 64], sizes = [8, 32], strides = [1, 1]} : vector<8x96xf32> to vector<8x32xf32>
    %226 = arith.mulf %222, %225 : vector<8x32xf32>
    %227 = arith.addf %224, %226 : vector<8x32xf32>
    %228 = math.tanh %227 : vector<8x32xf32>
    %cst_57 = arith.constant 1.000000e+00 : f32
    %229 = vector.broadcast %cst_57 : f32 to vector<8x32xf32>
    %230 = arith.subf %229, %223 : vector<8x32xf32>
    %231 = arith.mulf %230, %228 : vector<8x32xf32>
    %232 = arith.mulf %223, %205 : vector<8x32xf32>
    %233 = arith.addf %231, %232 : vector<8x32xf32>
    %234 = arith.index_cast %209 : i32 to index
    %c0_58 = arith.constant 0 : index
    %235 = vector.load %arg11[%234, %c0_58] : memref<64x32xf32, #tpu.memory_space<vmem>>, vector<8x32xf32>
    tpu.vector_store %arg11[%234, %c0_58], %233 {strides = array<i32>} : memref<64x32xf32, #tpu.memory_space<vmem>>, vector<8x32xf32>,
    %c8_i32_59 = arith.constant 8 : i32
    %c0_60 = arith.constant 0 : index
    %c0_61 = arith.constant 0 : index
    %236 = vector.load %arg5[%c0_60, %c0_61] : memref<32x96xf32, #tpu.memory_space<vmem>>, vector<32x96xf32>
    %c0_62 = arith.constant 0 : index
    %c0_63 = arith.constant 0 : index
    %237 = vector.load %arg6[%c0_62, %c0_63] : memref<32x96xf32, #tpu.memory_space<vmem>>, vector<32x96xf32>
    %c0_64 = arith.constant 0 : index
    %c0_65 = arith.constant 0 : index
    %238 = vector.load %arg7[%c0_64, %c0_65] : memref<1x96xf32, #tpu.memory_space<vmem>>, vector<1x96xf32>
    %c0_66 = arith.constant 0 : index
    %c0_67 = arith.constant 0 : index
    %239 = vector.load %arg8[%c0_66, %c0_67] : memref<1x96xf32, #tpu.memory_space<vmem>>, vector<1x96xf32>
    %240 = vector.shape_cast %239 : vector<1x96xf32> to vector<1x96xf32>
    %241 = vector.broadcast %240 : vector<1x96xf32> to vector<8x96xf32>
    %c0_68 = arith.constant 0 : index
    %c0_69 = arith.constant 0 : index
    %242 = vector.load %arg11[%c0_68, %c0_69] : memref<64x32xf32, #tpu.memory_space<vmem>>, vector<64x32xf32>
    %cst_70 = arith.constant dense<0.000000e+00> : vector<64x96xf32>
    %243 = tpu.matmul %242, %236, %cst_70 {dimension_numbers = #tpu.dot_dimension_numbers<[1], [0], [0], [1], [0, 0, 1, 1], [], []>} : vector<64x32xf32>, vector<32x96xf32>, vector<64x96xf32> -> vector<64x96xf32>
    %244 = vector.broadcast %238 : vector<1x96xf32> to vector<64x96xf32>
    %245 = arith.addf %243, %244 : vector<64x96xf32>
    %c0_71 = arith.constant 0 : index
    %c0_72 = arith.constant 0 : index
    %246 = vector.load %arg10[%c0_71, %c0_72] : memref<64x96xf32, #tpu.memory_space<vmem>>, vector<64x96xf32>
    tpu.vector_store %arg10[%c0_71, %c0_72], %245 {strides = array<i32>} : memref<64x96xf32, #tpu.memory_space<vmem>>, vector<64x96xf32>,
    %cst_73 = arith.constant 0.000000e+00 : f32
    %247 = vector.broadcast %cst_73 : f32 to vector<8x32xf32>
    %c0_i32_74 = arith.constant 0 : i32
    %c8_i32_75 = arith.constant 8 : i32
    %248 = arith.muli %c0_i32_74, %c8_i32_75 : i32
    %249 = tpu.assume_multiple %248, 8 : i32
    %250 = arith.index_cast %249 : i32 to index
    %c0_76 = arith.constant 0 : index
    %251 = vector.load %arg10[%250, %c0_76] : memref<64x96xf32, #tpu.memory_space<vmem>>, vector<8x96xf32>
    %cst_77 = arith.constant dense<0.000000e+00> : vector<8x96xf32>
    %252 = tpu.matmul %247, %237, %cst_77 {dimension_numbers = #tpu.dot_dimension_numbers<[1], [0], [0], [1], [0, 0, 1, 1], [], []>} : vector<8x32xf32>, vector<32x96xf32>, vector<8x96xf32> -> vector<8x96xf32>
    %253 = arith.addf %252, %241 : vector<8x96xf32>
    %254 = vector.extract_strided_slice %251 {offsets = [0, 0], sizes = [8, 64], strides = [1, 1]} : vector<8x96xf32> to vector<8x64xf32>
    %255 = vector.extract_strided_slice %253 {offsets = [0, 0], sizes = [8, 64], strides = [1, 1]} : vector<8x96xf32> to vector<8x64xf32>
    %256 = arith.addf %254, %255 : vector<8x64xf32>
    %257 = arith.negf %256 : vector<8x64xf32>
    %258 = math.exp %257 : vector<8x64xf32>
    %cst_78 = arith.constant 1.000000e+00 : f32
    %259 = vector.broadcast %cst_78 : f32 to vector<8x64xf32>
    %260 = arith.addf %259, %258 : vector<8x64xf32>
    %261 = arith.divf %259, %260 : vector<8x64xf32>
    %262 = vector.extract_strided_slice %261 {offsets = [0, 0], sizes = [8, 32], strides = [1, 1]} : vector<8x64xf32> to vector<8x32xf32>
    %263 = vector.extract_strided_slice %261 {offsets = [0, 32], sizes = [8, 32], strides = [1, 1]} : vector<8x64xf32> to vector<8x32xf32>
    %264 = vector.extract_strided_slice %251 {offsets = [0, 64], sizes = [8, 32], strides = [1, 1]} : vector<8x96xf32> to vector<8x32xf32>
    %265 = vector.extract_strided_slice %253 {offsets = [0, 64], sizes = [8, 32], strides = [1, 1]} : vector<8x96xf32> to vector<8x32xf32>
    %266 = arith.mulf %262, %265 : vector<8x32xf32>
    %267 = arith.addf %264, %266 : vector<8x32xf32>
    %268 = math.tanh %267 : vector<8x32xf32>
    %cst_79 = arith.constant 1.000000e+00 : f32
    %269 = vector.broadcast %cst_79 : f32 to vector<8x32xf32>
    %270 = arith.subf %269, %263 : vector<8x32xf32>
    %271 = arith.mulf %270, %268 : vector<8x32xf32>
    %272 = arith.mulf %263, %247 : vector<8x32xf32>
    %273 = arith.addf %271, %272 : vector<8x32xf32>
    %274 = arith.index_cast %249 : i32 to index
    %c0_80 = arith.constant 0 : index
    %275 = vector.load %arg9[%274, %c0_80] : memref<64x32xf32, #tpu.memory_space<vmem>>, vector<8x32xf32>
    tpu.vector_store %arg9[%274, %c0_80], %273 {strides = array<i32>} : memref<64x32xf32, #tpu.memory_space<vmem>>, vector<8x32xf32>,
    %c1_i32_81 = arith.constant 1 : i32
    %c8_i32_82 = arith.constant 8 : i32
    %276 = arith.muli %c1_i32_81, %c8_i32_82 : i32
    %277 = tpu.assume_multiple %276, 8 : i32
    %278 = arith.index_cast %277 : i32 to index
    %c0_83 = arith.constant 0 : index
    %279 = vector.load %arg10[%278, %c0_83] : memref<64x96xf32, #tpu.memory_space<vmem>>, vector<8x96xf32>
    %cst_84 = arith.constant dense<0.000000e+00> : vector<8x96xf32>
    %280 = tpu.matmul %273, %237, %cst_84 {dimension_numbers = #tpu.dot_dimension_numbers<[1], [0], [0], [1], [0, 0, 1, 1], [], []>} : vector<8x32xf32>, vector<32x96xf32>, vector<8x96xf32> -> vector<8x96xf32>
    %281 = arith.addf %280, %241 : vector<8x96xf32>
    %282 = vector.extract_strided_slice %279 {offsets = [0, 0], sizes = [8, 64], strides = [1, 1]} : vector<8x96xf32> to vector<8x64xf32>
    %283 = vector.extract_strided_slice %281 {offsets = [0, 0], sizes = [8, 64], strides = [1, 1]} : vector<8x96xf32> to vector<8x64xf32>
    %284 = arith.addf %282, %283 : vector<8x64xf32>
    %285 = arith.negf %284 : vector<8x64xf32>
    %286 = math.exp %285 : vector<8x64xf32>
    %cst_85 = arith.constant 1.000000e+00 : f32
    %287 = vector.broadcast %cst_85 : f32 to vector<8x64xf32>
    %288 = arith.addf %287, %286 : vector<8x64xf32>
    %289 = arith.divf %287, %288 : vector<8x64xf32>
    %290 = vector.extract_strided_slice %289 {offsets = [0, 0], sizes = [8, 32], strides = [1, 1]} : vector<8x64xf32> to vector<8x32xf32>
    %291 = vector.extract_strided_slice %289 {offsets = [0, 32], sizes = [8, 32], strides = [1, 1]} : vector<8x64xf32> to vector<8x32xf32>
    %292 = vector.extract_strided_slice %279 {offsets = [0, 64], sizes = [8, 32], strides = [1, 1]} : vector<8x96xf32> to vector<8x32xf32>
    %293 = vector.extract_strided_slice %281 {offsets = [0, 64], sizes = [8, 32], strides = [1, 1]} : vector<8x96xf32> to vector<8x32xf32>
    %294 = arith.mulf %290, %293 : vector<8x32xf32>
    %295 = arith.addf %292, %294 : vector<8x32xf32>
    %296 = math.tanh %295 : vector<8x32xf32>
    %cst_86 = arith.constant 1.000000e+00 : f32
    %297 = vector.broadcast %cst_86 : f32 to vector<8x32xf32>
    %298 = arith.subf %297, %291 : vector<8x32xf32>
    %299 = arith.mulf %298, %296 : vector<8x32xf32>
    %300 = arith.mulf %291, %273 : vector<8x32xf32>
    %301 = arith.addf %299, %300 : vector<8x32xf32>
    %302 = arith.index_cast %277 : i32 to index
    %c0_87 = arith.constant 0 : index
    %303 = vector.load %arg9[%302, %c0_87] : memref<64x32xf32, #tpu.memory_space<vmem>>, vector<8x32xf32>
    tpu.vector_store %arg9[%302, %c0_87], %301 {strides = array<i32>} : memref<64x32xf32, #tpu.memory_space<vmem>>, vector<8x32xf32>,
    %c2_i32_88 = arith.constant 2 : i32
    %c8_i32_89 = arith.constant 8 : i32
    %304 = arith.muli %c2_i32_88, %c8_i32_89 : i32
    %305 = tpu.assume_multiple %304, 8 : i32
    %306 = arith.index_cast %305 : i32 to index
    %c0_90 = arith.constant 0 : index
    %307 = vector.load %arg10[%306, %c0_90] : memref<64x96xf32, #tpu.memory_space<vmem>>, vector<8x96xf32>
    %cst_91 = arith.constant dense<0.000000e+00> : vector<8x96xf32>
    %308 = tpu.matmul %301, %237, %cst_91 {dimension_numbers = #tpu.dot_dimension_numbers<[1], [0], [0], [1], [0, 0, 1, 1], [], []>} : vector<8x32xf32>, vector<32x96xf32>, vector<8x96xf32> -> vector<8x96xf32>
    %309 = arith.addf %308, %241 : vector<8x96xf32>
    %310 = vector.extract_strided_slice %307 {offsets = [0, 0], sizes = [8, 64], strides = [1, 1]} : vector<8x96xf32> to vector<8x64xf32>
    %311 = vector.extract_strided_slice %309 {offsets = [0, 0], sizes = [8, 64], strides = [1, 1]} : vector<8x96xf32> to vector<8x64xf32>
    %312 = arith.addf %310, %311 : vector<8x64xf32>
    %313 = arith.negf %312 : vector<8x64xf32>
    %314 = math.exp %313 : vector<8x64xf32>
    %cst_92 = arith.constant 1.000000e+00 : f32
    %315 = vector.broadcast %cst_92 : f32 to vector<8x64xf32>
    %316 = arith.addf %315, %314 : vector<8x64xf32>
    %317 = arith.divf %315, %316 : vector<8x64xf32>
    %318 = vector.extract_strided_slice %317 {offsets = [0, 0], sizes = [8, 32], strides = [1, 1]} : vector<8x64xf32> to vector<8x32xf32>
    %319 = vector.extract_strided_slice %317 {offsets = [0, 32], sizes = [8, 32], strides = [1, 1]} : vector<8x64xf32> to vector<8x32xf32>
    %320 = vector.extract_strided_slice %307 {offsets = [0, 64], sizes = [8, 32], strides = [1, 1]} : vector<8x96xf32> to vector<8x32xf32>
    %321 = vector.extract_strided_slice %309 {offsets = [0, 64], sizes = [8, 32], strides = [1, 1]} : vector<8x96xf32> to vector<8x32xf32>
    %322 = arith.mulf %318, %321 : vector<8x32xf32>
    %323 = arith.addf %320, %322 : vector<8x32xf32>
    %324 = math.tanh %323 : vector<8x32xf32>
    %cst_93 = arith.constant 1.000000e+00 : f32
    %325 = vector.broadcast %cst_93 : f32 to vector<8x32xf32>
    %326 = arith.subf %325, %319 : vector<8x32xf32>
    %327 = arith.mulf %326, %324 : vector<8x32xf32>
    %328 = arith.mulf %319, %301 : vector<8x32xf32>
    %329 = arith.addf %327, %328 : vector<8x32xf32>
    %330 = arith.index_cast %305 : i32 to index
    %c0_94 = arith.constant 0 : index
    %331 = vector.load %arg9[%330, %c0_94] : memref<64x32xf32, #tpu.memory_space<vmem>>, vector<8x32xf32>
    tpu.vector_store %arg9[%330, %c0_94], %329 {strides = array<i32>} : memref<64x32xf32, #tpu.memory_space<vmem>>, vector<8x32xf32>,
    %c3_i32_95 = arith.constant 3 : i32
    %c8_i32_96 = arith.constant 8 : i32
    %332 = arith.muli %c3_i32_95, %c8_i32_96 : i32
    %333 = tpu.assume_multiple %332, 8 : i32
    %334 = arith.index_cast %333 : i32 to index
    %c0_97 = arith.constant 0 : index
    %335 = vector.load %arg10[%334, %c0_97] : memref<64x96xf32, #tpu.memory_space<vmem>>, vector<8x96xf32>
    %cst_98 = arith.constant dense<0.000000e+00> : vector<8x96xf32>
    %336 = tpu.matmul %329, %237, %cst_98 {dimension_numbers = #tpu.dot_dimension_numbers<[1], [0], [0], [1], [0, 0, 1, 1], [], []>} : vector<8x32xf32>, vector<32x96xf32>, vector<8x96xf32> -> vector<8x96xf32>
    %337 = arith.addf %336, %241 : vector<8x96xf32>
    %338 = vector.extract_strided_slice %335 {offsets = [0, 0], sizes = [8, 64], strides = [1, 1]} : vector<8x96xf32> to vector<8x64xf32>
    %339 = vector.extract_strided_slice %337 {offsets = [0, 0], sizes = [8, 64], strides = [1, 1]} : vector<8x96xf32> to vector<8x64xf32>
    %340 = arith.addf %338, %339 : vector<8x64xf32>
    %341 = arith.negf %340 : vector<8x64xf32>
    %342 = math.exp %341 : vector<8x64xf32>
    %cst_99 = arith.constant 1.000000e+00 : f32
    %343 = vector.broadcast %cst_99 : f32 to vector<8x64xf32>
    %344 = arith.addf %343, %342 : vector<8x64xf32>
    %345 = arith.divf %343, %344 : vector<8x64xf32>
    %346 = vector.extract_strided_slice %345 {offsets = [0, 0], sizes = [8, 32], strides = [1, 1]} : vector<8x64xf32> to vector<8x32xf32>
    %347 = vector.extract_strided_slice %345 {offsets = [0, 32], sizes = [8, 32], strides = [1, 1]} : vector<8x64xf32> to vector<8x32xf32>
    %348 = vector.extract_strided_slice %335 {offsets = [0, 64], sizes = [8, 32], strides = [1, 1]} : vector<8x96xf32> to vector<8x32xf32>
    %349 = vector.extract_strided_slice %337 {offsets = [0, 64], sizes = [8, 32], strides = [1, 1]} : vector<8x96xf32> to vector<8x32xf32>
    %350 = arith.mulf %346, %349 : vector<8x32xf32>
    %351 = arith.addf %348, %350 : vector<8x32xf32>
    %352 = math.tanh %351 : vector<8x32xf32>
    %cst_100 = arith.constant 1.000000e+00 : f32
    %353 = vector.broadcast %cst_100 : f32 to vector<8x32xf32>
    %354 = arith.subf %353, %347 : vector<8x32xf32>
    %355 = arith.mulf %354, %352 : vector<8x32xf32>
    %356 = arith.mulf %347, %329 : vector<8x32xf32>
    %357 = arith.addf %355, %356 : vector<8x32xf32>
    %358 = arith.index_cast %333 : i32 to index
    %c0_101 = arith.constant 0 : index
    %359 = vector.load %arg9[%358, %c0_101] : memref<64x32xf32, #tpu.memory_space<vmem>>, vector<8x32xf32>
    tpu.vector_store %arg9[%358, %c0_101], %357 {strides = array<i32>} : memref<64x32xf32, #tpu.memory_space<vmem>>, vector<8x32xf32>,
    %c4_i32_102 = arith.constant 4 : i32
    %c8_i32_103 = arith.constant 8 : i32
    %360 = arith.muli %c4_i32_102, %c8_i32_103 : i32
    %361 = tpu.assume_multiple %360, 8 : i32
    %362 = arith.index_cast %361 : i32 to index
    %c0_104 = arith.constant 0 : index
    %363 = vector.load %arg10[%362, %c0_104] : memref<64x96xf32, #tpu.memory_space<vmem>>, vector<8x96xf32>
    %cst_105 = arith.constant dense<0.000000e+00> : vector<8x96xf32>
    %364 = tpu.matmul %357, %237, %cst_105 {dimension_numbers = #tpu.dot_dimension_numbers<[1], [0], [0], [1], [0, 0, 1, 1], [], []>} : vector<8x32xf32>, vector<32x96xf32>, vector<8x96xf32> -> vector<8x96xf32>
    %365 = arith.addf %364, %241 : vector<8x96xf32>
    %366 = vector.extract_strided_slice %363 {offsets = [0, 0], sizes = [8, 64], strides = [1, 1]} : vector<8x96xf32> to vector<8x64xf32>
    %367 = vector.extract_strided_slice %365 {offsets = [0, 0], sizes = [8, 64], strides = [1, 1]} : vector<8x96xf32> to vector<8x64xf32>
    %368 = arith.addf %366, %367 : vector<8x64xf32>
    %369 = arith.negf %368 : vector<8x64xf32>
    %370 = math.exp %369 : vector<8x64xf32>
    %cst_106 = arith.constant 1.000000e+00 : f32
    %371 = vector.broadcast %cst_106 : f32 to vector<8x64xf32>
    %372 = arith.addf %371, %370 : vector<8x64xf32>
    %373 = arith.divf %371, %372 : vector<8x64xf32>
    %374 = vector.extract_strided_slice %373 {offsets = [0, 0], sizes = [8, 32], strides = [1, 1]} : vector<8x64xf32> to vector<8x32xf32>
    %375 = vector.extract_strided_slice %373 {offsets = [0, 32], sizes = [8, 32], strides = [1, 1]} : vector<8x64xf32> to vector<8x32xf32>
    %376 = vector.extract_strided_slice %363 {offsets = [0, 64], sizes = [8, 32], strides = [1, 1]} : vector<8x96xf32> to vector<8x32xf32>
    %377 = vector.extract_strided_slice %365 {offsets = [0, 64], sizes = [8, 32], strides = [1, 1]} : vector<8x96xf32> to vector<8x32xf32>
    %378 = arith.mulf %374, %377 : vector<8x32xf32>
    %379 = arith.addf %376, %378 : vector<8x32xf32>
    %380 = math.tanh %379 : vector<8x32xf32>
    %cst_107 = arith.constant 1.000000e+00 : f32
    %381 = vector.broadcast %cst_107 : f32 to vector<8x32xf32>
    %382 = arith.subf %381, %375 : vector<8x32xf32>
    %383 = arith.mulf %382, %380 : vector<8x32xf32>
    %384 = arith.mulf %375, %357 : vector<8x32xf32>
    %385 = arith.addf %383, %384 : vector<8x32xf32>
    %386 = arith.index_cast %361 : i32 to index
    %c0_108 = arith.constant 0 : index
    %387 = vector.load %arg9[%386, %c0_108] : memref<64x32xf32, #tpu.memory_space<vmem>>, vector<8x32xf32>
    tpu.vector_store %arg9[%386, %c0_108], %385 {strides = array<i32>} : memref<64x32xf32, #tpu.memory_space<vmem>>, vector<8x32xf32>,
    %c5_i32_109 = arith.constant 5 : i32
    %c8_i32_110 = arith.constant 8 : i32
    %388 = arith.muli %c5_i32_109, %c8_i32_110 : i32
    %389 = tpu.assume_multiple %388, 8 : i32
    %390 = arith.index_cast %389 : i32 to index
    %c0_111 = arith.constant 0 : index
    %391 = vector.load %arg10[%390, %c0_111] : memref<64x96xf32, #tpu.memory_space<vmem>>, vector<8x96xf32>
    %cst_112 = arith.constant dense<0.000000e+00> : vector<8x96xf32>
    %392 = tpu.matmul %385, %237, %cst_112 {dimension_numbers = #tpu.dot_dimension_numbers<[1], [0], [0], [1], [0, 0, 1, 1], [], []>} : vector<8x32xf32>, vector<32x96xf32>, vector<8x96xf32> -> vector<8x96xf32>
    %393 = arith.addf %392, %241 : vector<8x96xf32>
    %394 = vector.extract_strided_slice %391 {offsets = [0, 0], sizes = [8, 64], strides = [1, 1]} : vector<8x96xf32> to vector<8x64xf32>
    %395 = vector.extract_strided_slice %393 {offsets = [0, 0], sizes = [8, 64], strides = [1, 1]} : vector<8x96xf32> to vector<8x64xf32>
    %396 = arith.addf %394, %395 : vector<8x64xf32>
    %397 = arith.negf %396 : vector<8x64xf32>
    %398 = math.exp %397 : vector<8x64xf32>
    %cst_113 = arith.constant 1.000000e+00 : f32
    %399 = vector.broadcast %cst_113 : f32 to vector<8x64xf32>
    %400 = arith.addf %399, %398 : vector<8x64xf32>
    %401 = arith.divf %399, %400 : vector<8x64xf32>
    %402 = vector.extract_strided_slice %401 {offsets = [0, 0], sizes = [8, 32], strides = [1, 1]} : vector<8x64xf32> to vector<8x32xf32>
    %403 = vector.extract_strided_slice %401 {offsets = [0, 32], sizes = [8, 32], strides = [1, 1]} : vector<8x64xf32> to vector<8x32xf32>
    %404 = vector.extract_strided_slice %391 {offsets = [0, 64], sizes = [8, 32], strides = [1, 1]} : vector<8x96xf32> to vector<8x32xf32>
    %405 = vector.extract_strided_slice %393 {offsets = [0, 64], sizes = [8, 32], strides = [1, 1]} : vector<8x96xf32> to vector<8x32xf32>
    %406 = arith.mulf %402, %405 : vector<8x32xf32>
    %407 = arith.addf %404, %406 : vector<8x32xf32>
    %408 = math.tanh %407 : vector<8x32xf32>
    %cst_114 = arith.constant 1.000000e+00 : f32
    %409 = vector.broadcast %cst_114 : f32 to vector<8x32xf32>
    %410 = arith.subf %409, %403 : vector<8x32xf32>
    %411 = arith.mulf %410, %408 : vector<8x32xf32>
    %412 = arith.mulf %403, %385 : vector<8x32xf32>
    %413 = arith.addf %411, %412 : vector<8x32xf32>
    %414 = arith.index_cast %389 : i32 to index
    %c0_115 = arith.constant 0 : index
    %415 = vector.load %arg9[%414, %c0_115] : memref<64x32xf32, #tpu.memory_space<vmem>>, vector<8x32xf32>
    tpu.vector_store %arg9[%414, %c0_115], %413 {strides = array<i32>} : memref<64x32xf32, #tpu.memory_space<vmem>>, vector<8x32xf32>,
    %c6_i32_116 = arith.constant 6 : i32
    %c8_i32_117 = arith.constant 8 : i32
    %416 = arith.muli %c6_i32_116, %c8_i32_117 : i32
    %417 = tpu.assume_multiple %416, 8 : i32
    %418 = arith.index_cast %417 : i32 to index
    %c0_118 = arith.constant 0 : index
    %419 = vector.load %arg10[%418, %c0_118] : memref<64x96xf32, #tpu.memory_space<vmem>>, vector<8x96xf32>
    %cst_119 = arith.constant dense<0.000000e+00> : vector<8x96xf32>
    %420 = tpu.matmul %413, %237, %cst_119 {dimension_numbers = #tpu.dot_dimension_numbers<[1], [0], [0], [1], [0, 0, 1, 1], [], []>} : vector<8x32xf32>, vector<32x96xf32>, vector<8x96xf32> -> vector<8x96xf32>
    %421 = arith.addf %420, %241 : vector<8x96xf32>
    %422 = vector.extract_strided_slice %419 {offsets = [0, 0], sizes = [8, 64], strides = [1, 1]} : vector<8x96xf32> to vector<8x64xf32>
    %423 = vector.extract_strided_slice %421 {offsets = [0, 0], sizes = [8, 64], strides = [1, 1]} : vector<8x96xf32> to vector<8x64xf32>
    %424 = arith.addf %422, %423 : vector<8x64xf32>
    %425 = arith.negf %424 : vector<8x64xf32>
    %426 = math.exp %425 : vector<8x64xf32>
    %cst_120 = arith.constant 1.000000e+00 : f32
    %427 = vector.broadcast %cst_120 : f32 to vector<8x64xf32>
    %428 = arith.addf %427, %426 : vector<8x64xf32>
    %429 = arith.divf %427, %428 : vector<8x64xf32>
    %430 = vector.extract_strided_slice %429 {offsets = [0, 0], sizes = [8, 32], strides = [1, 1]} : vector<8x64xf32> to vector<8x32xf32>
    %431 = vector.extract_strided_slice %429 {offsets = [0, 32], sizes = [8, 32], strides = [1, 1]} : vector<8x64xf32> to vector<8x32xf32>
    %432 = vector.extract_strided_slice %419 {offsets = [0, 64], sizes = [8, 32], strides = [1, 1]} : vector<8x96xf32> to vector<8x32xf32>
    %433 = vector.extract_strided_slice %421 {offsets = [0, 64], sizes = [8, 32], strides = [1, 1]} : vector<8x96xf32> to vector<8x32xf32>
    %434 = arith.mulf %430, %433 : vector<8x32xf32>
    %435 = arith.addf %432, %434 : vector<8x32xf32>
    %436 = math.tanh %435 : vector<8x32xf32>
    %cst_121 = arith.constant 1.000000e+00 : f32
    %437 = vector.broadcast %cst_121 : f32 to vector<8x32xf32>
    %438 = arith.subf %437, %431 : vector<8x32xf32>
    %439 = arith.mulf %438, %436 : vector<8x32xf32>
    %440 = arith.mulf %431, %413 : vector<8x32xf32>
    %441 = arith.addf %439, %440 : vector<8x32xf32>
    %442 = arith.index_cast %417 : i32 to index
    %c0_122 = arith.constant 0 : index
    %443 = vector.load %arg9[%442, %c0_122] : memref<64x32xf32, #tpu.memory_space<vmem>>, vector<8x32xf32>
    tpu.vector_store %arg9[%442, %c0_122], %441 {strides = array<i32>} : memref<64x32xf32, #tpu.memory_space<vmem>>, vector<8x32xf32>,
    %c7_i32_123 = arith.constant 7 : i32
    %c8_i32_124 = arith.constant 8 : i32
    %444 = arith.muli %c7_i32_123, %c8_i32_124 : i32
    %445 = tpu.assume_multiple %444, 8 : i32
    %446 = arith.index_cast %445 : i32 to index
    %c0_125 = arith.constant 0 : index
    %447 = vector.load %arg10[%446, %c0_125] : memref<64x96xf32, #tpu.memory_space<vmem>>, vector<8x96xf32>
    %cst_126 = arith.constant dense<0.000000e+00> : vector<8x96xf32>
    %448 = tpu.matmul %441, %237, %cst_126 {dimension_numbers = #tpu.dot_dimension_numbers<[1], [0], [0], [1], [0, 0, 1, 1], [], []>} : vector<8x32xf32>, vector<32x96xf32>, vector<8x96xf32> -> vector<8x96xf32>
    %449 = arith.addf %448, %241 : vector<8x96xf32>
    %450 = vector.extract_strided_slice %447 {offsets = [0, 0], sizes = [8, 64], strides = [1, 1]} : vector<8x96xf32> to vector<8x64xf32>
    %451 = vector.extract_strided_slice %449 {offsets = [0, 0], sizes = [8, 64], strides = [1, 1]} : vector<8x96xf32> to vector<8x64xf32>
    %452 = arith.addf %450, %451 : vector<8x64xf32>
    %453 = arith.negf %452 : vector<8x64xf32>
    %454 = math.exp %453 : vector<8x64xf32>
    %cst_127 = arith.constant 1.000000e+00 : f32
    %455 = vector.broadcast %cst_127 : f32 to vector<8x64xf32>
    %456 = arith.addf %455, %454 : vector<8x64xf32>
    %457 = arith.divf %455, %456 : vector<8x64xf32>
    %458 = vector.extract_strided_slice %457 {offsets = [0, 0], sizes = [8, 32], strides = [1, 1]} : vector<8x64xf32> to vector<8x32xf32>
    %459 = vector.extract_strided_slice %457 {offsets = [0, 32], sizes = [8, 32], strides = [1, 1]} : vector<8x64xf32> to vector<8x32xf32>
    %460 = vector.extract_strided_slice %447 {offsets = [0, 64], sizes = [8, 32], strides = [1, 1]} : vector<8x96xf32> to vector<8x32xf32>
    %461 = vector.extract_strided_slice %449 {offsets = [0, 64], sizes = [8, 32], strides = [1, 1]} : vector<8x96xf32> to vector<8x32xf32>
    %462 = arith.mulf %458, %461 : vector<8x32xf32>
    %463 = arith.addf %460, %462 : vector<8x32xf32>
    %464 = math.tanh %463 : vector<8x32xf32>
    %cst_128 = arith.constant 1.000000e+00 : f32
    %465 = vector.broadcast %cst_128 : f32 to vector<8x32xf32>
    %466 = arith.subf %465, %459 : vector<8x32xf32>
    %467 = arith.mulf %466, %464 : vector<8x32xf32>
    %468 = arith.mulf %459, %441 : vector<8x32xf32>
    %469 = arith.addf %467, %468 : vector<8x32xf32>
    %470 = arith.index_cast %445 : i32 to index
    %c0_129 = arith.constant 0 : index
    %471 = vector.load %arg9[%470, %c0_129] : memref<64x32xf32, #tpu.memory_space<vmem>>, vector<8x32xf32>
    tpu.vector_store %arg9[%470, %c0_129], %469 {strides = array<i32>} : memref<64x32xf32, #tpu.memory_space<vmem>>, vector<8x32xf32>,
    %c8_i32_130 = arith.constant 8 : i32
    return
  }
}

</mosaic_0001>

<llo_original>
// kernel: glove_gru_encoder.1
$region0: #{glove_gru_encoder.1}
  #allocation0 [shape = 'u32[]', space=smem, size = 0x4, offset = 0x4, fixed_abs, tag = 'smem constant byte address 0x4 - core index']
  #allocation1 [shape = 'u32[144,128]{1,0:T(1,128)}', space=vmem, size = 0x12000, scoped, tag = 'internal scratch']
  #allocation2 [shape = 'f32[64,96]{1,0:T(8,128)}', space=vmem, size = 0x8000, scoped, tag = 'scratch operand']
  #allocation3 [shape = 'f32[64,32]{1,0:T(8,128)}', space=vmem, size = 0x8000, scoped, tag = 'scratch operand']
  %s0 = inlined_call_operand.vmem [shape: f32[64,384], index: 0, kind: input, shape index: {}]
  %s1 = inlined_call_operand.vmem [shape: f32[384,96], index: 1, kind: input, shape index: {}]
  %s2 = inlined_call_operand.vmem [shape: f32[32,96], index: 2, kind: input, shape index: {}]
  %s3 = inlined_call_operand.vmem [shape: f32[1,96], index: 3, kind: input, shape index: {}]
  %s4 = inlined_call_operand.vmem [shape: f32[1,96], index: 4, kind: input, shape index: {}]
  %s5 = inlined_call_operand.vmem [shape: f32[32,96], index: 5, kind: input, shape index: {}]
  %s6 = inlined_call_operand.vmem [shape: f32[32,96], index: 6, kind: input, shape index: {}]
  %s7 = inlined_call_operand.vmem [shape: f32[1,96], index: 7, kind: input, shape index: {}]
  %s8 = inlined_call_operand.vmem [shape: f32[1,96], index: 8, kind: input, shape index: {}]
  %s9 = inlined_call_operand.vmem [shape: f32[64,32], index: 9, kind: output, shape index: {}]
  %s10 = sld [smem:[#allocation0]]
  $region46: #{glove_gru_encoder.1} parent=0
    _
  %s12 = ssub.s32 1, %s10
  %s13 = scalar_select 0, %s12, %s10
  // Predicated region
  $region2: #{glove_gru_encoder.1} parent=0 // pred_check
    _
  $region3: #{glove_gru_encoder.1} parent=0 // pred_check_branch
    %15 = sbr.rel (0) target = $region5
  $region4: #{glove_gru_encoder.1} parent=0 // pred_region
    _
  $region5: #{glove_gru_encoder.1} parent=0 // pred_fallthru
    _
  // Predicated region
  $region6: #{glove_gru_encoder.1} parent=0 // pred_check
    _
  $region7: #{glove_gru_encoder.1} parent=0 // pred_check_branch
    %17 = sbr.rel (0) target = $region9
  $region8: #{glove_gru_encoder.1} parent=0 // pred_region
    _
  $region9: #{glove_gru_encoder.1} parent=0 // pred_fallthru
    _
  // Predicated region
  $region10: #{glove_gru_encoder.1} parent=0 // pred_check
    _
  $region11: #{glove_gru_encoder.1} parent=0 // pred_check_branch
    %19 = sbr.rel (0) target = $region13
  $region12: #{glove_gru_encoder.1} parent=0 // pred_region
    _
  $region13: #{glove_gru_encoder.1} parent=0 // pred_fallthru
    _
  // Predicated region
  $region14: #{glove_gru_encoder.1} parent=0 // pred_check
    _
  $region15: #{glove_gru_encoder.1} parent=0 // pred_check_branch
    %21 = sbr.rel (0) target = $region17
  $region16: #{glove_gru_encoder.1} parent=0 // pred_region
    _
  $region17: #{glove_gru_encoder.1} parent=0 // pred_fallthru
    _
  // Predicated region
  $region18: #{glove_gru_encoder.1} parent=0 // pred_check
    _
  $region19: #{glove_gru_encoder.1} parent=0 // pred_check_branch
    %23 = sbr.rel (0) target = $region21
  $region20: #{glove_gru_encoder.1} parent=0 // pred_region
    _
  $region21: #{glove_gru_encoder.1} parent=0 // pred_fallthru
    _
  // Predicated region
  $region22: #{glove_gru_encoder.1} parent=0 // pred_check
    _
  $region23: #{glove_gru_encoder.1} parent=0 // pred_check_branch
    %25 = sbr.rel (0) target = $region25
  $region24: #{glove_gru_encoder.1} parent=0 // pred_region
    _
  $region25: #{glove_gru_encoder.1} parent=0 // pred_fallthru
    _
  // Predicated region
  $region26: #{glove_gru_encoder.1} parent=0 // pred_check
    _
  $region27: #{glove_gru_encoder.1} parent=0 // pred_check_branch
    %27 = sbr.rel (0) target = $region29
  $region28: #{glove_gru_encoder.1} parent=0 // pred_region
    _
  $region29: #{glove_gru_encoder.1} parent=0 // pred_fallthru
    _
  // Predicated region
  $region30: #{glove_gru_encoder.1} parent=0 // pred_check
    _
  $region31: #{glove_gru_encoder.1} parent=0 // pred_check_branch
    %29 = sbr.rel (0) target = $region33
  $region32: #{glove_gru_encoder.1} parent=0 // pred_region
    _
  $region33: #{glove_gru_encoder.1} parent=0 // pred_fallthru
    _
  // Predicated region
  $region34: #{glove_gru_encoder.1} parent=0 // pred_check
    _
  $region35: #{glove_gru_encoder.1} parent=0 // pred_check_branch
    %31 = sbr.rel (0) target = $region37
  $region36: #{glove_gru_encoder.1} parent=0 // pred_region
    _
  $region37: #{glove_gru_encoder.1} parent=0 // pred_fallthru
    _
  %v32 = vld [vmem:[%s1] sm:$0xff]
  %v33 = vld [vmem:[%s1 + $0x8] sm:$0xff]
  %v34 = vld [vmem:[%s1 + $0x10] sm:$0xff]
  %v35 = vld [vmem:[%s1 + $0x18] sm:$0xff]
  %v36 = vld [vmem:[%s1 + $0x20] sm:$0xff]
  %v37 = vld [vmem:[%s1 + $0x28] sm:$0xff]
  %v38 = vld [vmem:[%s1 + $0x30] sm:$0xff]
  %v39 = vld [vmem:[%s1 + $0x38] sm:$0xff]
  %v40 = vld [vmem:[%s1 + $0x40] sm:$0xff]
  %v41 = vld [vmem:[%s1 + $0x48] sm:$0xff]
  %v42 = vld [vmem:[%s1 + $0x50] sm:$0xff]
  %v43 = vld [vmem:[%s1 + $0x58] sm:$0xff]
  %v44 = vld [vmem:[%s1 + $0x60] sm:$0xff]
  %v45 = vld [vmem:[%s1 + $0x68] sm:$0xff]
  %v46 = vld [vmem:[%s1 + $0x70] sm:$0xff]
  %v47 = vld [vmem:[%s1 + $0x78] sm:$0xff]
  %v48 = vld [vmem:[%s1 + $0x80] sm:$0xff]
  %v49 = vld [vmem:[%s1 + $0x88] sm:$0xff]
  %v50 = vld [vmem:[%s1 + $0x90] sm:$0xff]
  %v51 = vld [vmem:[%s1 + $0x98] sm:$0xff]
  %v52 = vld [vmem:[%s1 + $0xa0] sm:$0xff]
  %v53 = vld [vmem:[%s1 + $0xa8] sm:$0xff]
  %v54 = vld [vmem:[%s1 + $0xb0] sm:$0xff]
  %v55 = vld [vmem:[%s1 + $0xb8] sm:$0xff]
  %v56 = vld [vmem:[%s1 + $0xc0] sm:$0xff]
  %v57 = vld [vmem:[%s1 + $0xc8] sm:$0xff]
  %v58 = vld [vmem:[%s1 + $0xd0] sm:$0xff]
  %v59 = vld [vmem:[%s1 + $0xd8] sm:$0xff]
  %v60 = vld [vmem:[%s1 + $0xe0] sm:$0xff]
  %v61 = vld [vmem:[%s1 + $0xe8] sm:$0xff]
  %v62 = vld [vmem:[%s1 + $0xf0] sm:$0xff]
  %v63 = vld [vmem:[%s1 + $0xf8] sm:$0xff]
  %v64 = vld [vmem:[%s1 + $0x100] sm:$0xff]
  %v65 = vld [vmem:[%s1 + $0x108] sm:$0xff]
  %v66 = vld [vmem:[%s1 + $0x110] sm:$0xff]
  %v67 = vld [vmem:[%s1 + $0x118] sm:$0xff]
  %v68 = vld [vmem:[%s1 + $0x120] sm:$0xff]
  %v69 = vld [vmem:[%s1 + $0x128] sm:$0xff]
  %v70 = vld [vmem:[%s1 + $0x130] sm:$0xff]
  %v71 = vld [vmem:[%s1 + $0x138] sm:$0xff]
  %v72 = vld [vmem:[%s1 + $0x140] sm:$0xff]
  %v73 = vld [vmem:[%s1 + $0x148] sm:$0xff]
  %v74 = vld [vmem:[%s1 + $0x150] sm:$0xff]
  %v75 = vld [vmem:[%s1 + $0x158] sm:$0xff]
  %v76 = vld [vmem:[%s1 + $0x160] sm:$0xff]
  %v77 = vld [vmem:[%s1 + $0x168] sm:$0xff]
  %v78 = vld [vmem:[%s1 + $0x170] sm:$0xff]
  %v79 = vld [vmem:[%s1 + $0x178] sm:$0xff]
  %v80 = vld [vmem:[%s2] sm:$0xff]
  %v81 = vld [vmem:[%s2 + $0x8] sm:$0xff]
  %v82 = vld [vmem:[%s2 + $0x10] sm:$0xff]
  %v83 = vld [vmem:[%s2 + $0x18] sm:$0xff]
  %v84 = vld [vmem:[%s3] sm:$0x1]
  %v85 = vld [vmem:[%s4] sm:$0x1]
  %v87 = vlaneseq
  %v88 = vshrl.u32 %v87, 7
  %v89 = vsub.s32 0, %v88
  %v90 = vrot.slane %v85, %v89
  %v92 = vld [vmem:[%s0] sm:$0xff]
  %v93 = vld [vmem:[%s0 + $0x8] sm:$0xff]
  %v94 = vld [vmem:[%s0 + $0x10] sm:$0xff]
  %v95 = vld [vmem:[%s0 + $0x18] sm:$0xff]
  %v96 = vld [vmem:[%s0 + $0x20] sm:$0xff]
  %v97 = vld [vmem:[%s0 + $0x28] sm:$0xff]
  %v98 = vld [vmem:[%s0 + $0x30] sm:$0xff]
  %v99 = vld [vmem:[%s0 + $0x38] sm:$0xff]
  %v100 = vld [vmem:[%s0 + $0x40] sm:$0xff]
  %v101 = vld [vmem:[%s0 + $0x48] sm:$0xff]
  %v102 = vld [vmem:[%s0 + $0x50] sm:$0xff]
  %v103 = vld [vmem:[%s0 + $0x58] sm:$0xff]
  %v104 = vld [vmem:[%s0 + $0x60] sm:$0xff]
  %v105 = vld [vmem:[%s0 + $0x68] sm:$0xff]
  %v106 = vld [vmem:[%s0 + $0x70] sm:$0xff]
  %v107 = vld [vmem:[%s0 + $0x78] sm:$0xff]
  %v108 = vld [vmem:[%s0 + $0x80] sm:$0xff]
  %v109 = vld [vmem:[%s0 + $0x88] sm:$0xff]
  %v110 = vld [vmem:[%s0 + $0x90] sm:$0xff]
  %v111 = vld [vmem:[%s0 + $0x98] sm:$0xff]
  %v112 = vld [vmem:[%s0 + $0xa0] sm:$0xff]
  %v113 = vld [vmem:[%s0 + $0xa8] sm:$0xff]
  %v114 = vld [vmem:[%s0 + $0xb0] sm:$0xff]
  %v115 = vld [vmem:[%s0 + $0xb8] sm:$0xff]
  %v117 = vlaneseq
  %v118 = vshrl.u32 %v117, 7
  %v119 = vsub.s32 0, %v118
  %v120 = vrot.slane %v84, %v119
  %122 = vmatprep.subr.mxu0 0.0
  %123 = vmatpush1.msra.mxu0 %v32
  %124 = vmatprep.subr.mxu0 0.0
  %125 = vmatpush1.msra.mxu0 %v33
  %126 = vmatprep.subr.mxu0 0.0
  %127 = vmatpush1.msra.mxu0 %v34
  %128 = vmatprep.subr.mxu0 0.0
  %129 = vmatpush1.msra.mxu0 %v35
  %130 = vmatprep.subr.mxu0 0.0
  %131 = vmatpush1.msra.mxu0 %v36
  %132 = vmatprep.subr.mxu0 0.0
  %133 = vmatpush1.msra.mxu0 %v37
  %134 = vmatprep.subr.mxu0 0.0
  %135 = vmatpush1.msra.mxu0 %v38
  %136 = vmatprep.subr.mxu0 0.0
  %137 = vmatpush1.msra.mxu0 %v39
  %138 = vmatprep.subr.mxu0 0.0
  %139 = vmatpush1.msra.mxu0 %v40
  %140 = vmatprep.subr.mxu0 0.0
  %141 = vmatpush1.msra.mxu0 %v41
  %142 = vmatprep.subr.mxu0 0.0
  %143 = vmatpush1.msra.mxu0 %v42
  %144 = vmatprep.subr.mxu0 0.0
  %145 = vmatpush1.msra.mxu0 %v43
  %146 = vmatprep.subr.mxu0 0.0
  %147 = vmatpush1.msra.mxu0 %v44
  %148 = vmatprep.subr.mxu0 0.0
  %149 = vmatpush1.msra.mxu0 %v45
  %150 = vmatprep.subr.mxu0 0.0
  %151 = vmatpush1.msra.mxu0 %v46
  %152 = vmatprep.subr.mxu0 0.0
  %153 = vmatpush1.msra.mxu0 %v47
  %154 = vmatprep.subr.mxu0 0.0
  %155 = vmatpush1.msra.mxu0 %v48
  %156 = vmatprep.subr.mxu0 0.0
  %157 = vmatpush1.msra.mxu0 %v49
  %158 = vmatprep.subr.mxu0 0.0
  %159 = vmatpush1.msra.mxu0 %v50
  %160 = vmatprep.subr.mxu0 0.0
  %161 = vmatpush1.msra.mxu0 %v51
  %162 = vmatprep.subr.mxu0 0.0
  %163 = vmatpush1.msra.mxu0 %v52
  %164 = vmatprep.subr.mxu0 0.0
  %165 = vmatpush1.msra.mxu0 %v53
  %166 = vmatprep.subr.mxu0 0.0
  %167 = vmatpush1.msra.mxu0 %v54
  %168 = vmatprep.subr.mxu0 0.0
  %169 = vmatpush1.msra.mxu0 %v55
  %170 = vmatprep.subr.mxu0 0.0
  %171 = vmatpush1.msra.mxu0 %v56
  %172 = vmatprep.subr.mxu0 0.0
  %173 = vmatpush1.msra.mxu0 %v57
  %174 = vmatprep.subr.mxu0 0.0
  %175 = vmatpush1.msra.mxu0 %v58
  %176 = vmatprep.subr.mxu0 0.0
  %177 = vmatpush1.msra.mxu0 %v59
  %178 = vmatprep.subr.mxu0 0.0
  %179 = vmatpush1.msra.mxu0 %v60
  %180 = vmatprep.subr.mxu0 0.0
  %181 = vmatpush1.msra.mxu0 %v61
  %182 = vmatprep.subr.mxu0 0.0
  %183 = vmatpush1.msra.mxu0 %v62
  %184 = vmatprep.subr.mxu0 0.0
  %185 = vmatpush1.msra.mxu0 %v63
  %186 = vmatprep.mubr.f32.mxu0 %v93
  %187 = vmatmul.mubr.f32.gmra.mrb[0].mxu0 %v92
  %v188 = vpop.f32.mrb[0].mxu0
  %v189 = vadd.f32 %v120, %v188
  %v190 = vpop.f32.mrb[0].mxu0
  %191 = vmatprep.mubr.f32.mxu0 %v96
  %192 = vmatmul.mubr.f32.gmra.mrb[0].mxu0 %v95
  %v193 = vpop.f32.mrb[0].mxu0
  %v194 = vadd.f32 %v120, %v193
  %v195 = vpop.f32.mrb[0].mxu0
  %196 = vmatprep.mubr.f32.mxu0 %v99
  %197 = vmatmul.mubr.f32.gmra.mrb[0].mxu0 %v98
  %v198 = vpop.f32.mrb[0].mxu0
  %v199 = vadd.f32 %v120, %v198
  %v200 = vpop.f32.mrb[0].mxu0
  %201 = vmatprep.mubr.f32.mxu0 %v102
  %202 = vmatmul.mubr.f32.gmra.mrb[0].mxu0 %v101
  %v203 = vpop.f32.mrb[0].mxu0
  %v204 = vadd.f32 %v120, %v203
  %v205 = vpop.f32.mrb[0].mxu0
  %206 = vmatprep.mubr.f32.mxu0 %v105
  %207 = vmatmul.mubr.f32.gmra.mrb[0].mxu0 %v104
  %v208 = vpop.f32.mrb[0].mxu0
  %v209 = vadd.f32 %v120, %v208
  %v210 = vpop.f32.mrb[0].mxu0
  %211 = vmatprep.mubr.f32.mxu0 %v108
  %212 = vmatmul.mubr.f32.gmra.mrb[0].mxu0 %v107
  %v213 = vpop.f32.mrb[0].mxu0
  %v214 = vadd.f32 %v120, %v213
  %v215 = vpop.f32.mrb[0].mxu0
  %216 = vmatprep.mubr.f32.mxu0 %v111
  %217 = vmatmul.mubr.f32.gmra.mrb[0].mxu0 %v110
  %v218 = vpop.f32.mrb[0].mxu0
  %v219 = vadd.f32 %v120, %v218
  %v220 = vpop.f32.mrb[0].mxu0
  %221 = vmatprep.mubr.f32.mxu0 %v114
  %222 = vmatmul.mubr.f32.gmra.mrb[0].mxu0 %v113
  %v223 = vpop.f32.mrb[0].mxu0
  %v224 = vadd.f32 %v120, %v223
  %v225 = vpop.f32.mrb[0].mxu0
  %226 = vdwg.mxu0
  %227 = vmatprep.subr.mxu0 0.0
  %228 = vmatpush1.msra.mxu0 %v64
  %229 = vmatprep.subr.mxu0 0.0
  %230 = vmatpush1.msra.mxu0 %v65
  %231 = vmatprep.subr.mxu0 0.0
  %232 = vmatpush1.msra.mxu0 %v66
  %233 = vmatprep.subr.mxu0 0.0
  %234 = vmatpush1.msra.mxu0 %v67
  %235 = vmatprep.subr.mxu0 0.0
  %236 = vmatpush1.msra.mxu0 %v68
  %237 = vmatprep.subr.mxu0 0.0
  %238 = vmatpush1.msra.mxu0 %v69
  %239 = vmatprep.subr.mxu0 0.0
  %240 = vmatpush1.msra.mxu0 %v70
  %241 = vmatprep.subr.mxu0 0.0
  %242 = vmatpush1.msra.mxu0 %v71
  %243 = vmatprep.subr.mxu0 0.0
  %244 = vmatpush1.msra.mxu0 %v72
  %245 = vmatprep.subr.mxu0 0.0
  %246 = vmatpush1.msra.mxu0 %v73
  %247 = vmatprep.subr.mxu0 0.0
  %248 = vmatpush1.msra.mxu0 %v74
  %249 = vmatprep.subr.mxu0 0.0
  %250 = vmatpush1.msra.mxu0 %v75
  %251 = vmatprep.subr.mxu0 0.0
  %252 = vmatpush1.msra.mxu0 %v76
  %253 = vmatprep.subr.mxu0 0.0
  %254 = vmatpush1.msra.mxu0 %v77
  %255 = vmatprep.subr.mxu0 0.0
  %256 = vmatpush1.msra.mxu0 %v78
  %257 = vmatprep.subr.mxu0 0.0
  %258 = vmatpush1.msra.mxu0 %v79
  %259 = vmatprep.subr.mxu0 0.0
  %260 = vmatpush1.msra.mxu0 0.0
  %261 = vmatprep.subr.mxu0 0.0
  %262 = vmatpush1.msra.mxu0 0.0
  %263 = vmatprep.subr.mxu0 0.0
  %264 = vmatpush1.msra.mxu0 0.0
  %265 = vmatprep.subr.mxu0 0.0
  %266 = vmatpush1.msra.mxu0 0.0
  %267 = vmatprep.subr.mxu0 0.0
  %268 = vmatpush1.msra.mxu0 0.0
  %269 = vmatprep.subr.mxu0 0.0
  %270 = vmatpush1.msra.mxu0 0.0
  %271 = vmatprep.subr.mxu0 0.0
  %272 = vmatpush1.msra.mxu0 0.0
  %273 = vmatprep.subr.mxu0 0.0
  %274 = vmatpush1.msra.mxu0 0.0
  %275 = vmatprep.subr.mxu0 0.0
  %276 = vmatpush1.msra.mxu0 0.0
  %277 = vmatprep.subr.mxu0 0.0
  %278 = vmatpush1.msra.mxu0 0.0
  %279 = vmatprep.subr.mxu0 0.0
  %280 = vmatpush1.msra.mxu0 0.0
  %281 = vmatprep.subr.mxu0 0.0
  %282 = vmatpush1.msra.mxu0 0.0
  %283 = vmatprep.subr.mxu0 0.0
  %284 = vmatpush1.msra.mxu0 0.0
  %285 = vmatprep.subr.mxu0 0.0
  %286 = vmatpush1.msra.mxu0 0.0
  %287 = vmatprep.subr.mxu0 0.0
  %288 = vmatpush1.msra.mxu0 0.0
  %289 = vmatprep.subr.mxu0 0.0
  %290 = vmatpush1.msra.mxu0 0.0
  %291 = vmatprep.mubr.f32.mxu0 0.0
  %292 = vmatmul.mubr.f32.gmra.mrb[0].mxu0 %v94
  %v293 = vpop.f32.mrb[0].mxu0
  %v294 = vadd.f32 %v189, %v293
  %v295 = vpop.f32.mrb[0].mxu0
  %296 = vmatprep.mubr.f32.mxu0 0.0
  %297 = vmatmul.mubr.f32.gmra.mrb[0].mxu0 %v97
  %v298 = vpop.f32.mrb[0].mxu0
  %v299 = vadd.f32 %v194, %v298
  %v300 = vpop.f32.mrb[0].mxu0
  %301 = vmatprep.mubr.f32.mxu0 0.0
  %302 = vmatmul.mubr.f32.gmra.mrb[0].mxu0 %v100
  %v303 = vpop.f32.mrb[0].mxu0
  %v304 = vadd.f32 %v199, %v303
  %v305 = vpop.f32.mrb[0].mxu0
  %306 = vmatprep.mubr.f32.mxu0 0.0
  %307 = vmatmul.mubr.f32.gmra.mrb[0].mxu0 %v103
  %v308 = vpop.f32.mrb[0].mxu0
  %v309 = vadd.f32 %v204, %v308
  %v310 = vpop.f32.mrb[0].mxu0
  %311 = vmatprep.mubr.f32.mxu0 0.0
  %312 = vmatmul.mubr.f32.gmra.mrb[0].mxu0 %v106
  %v313 = vpop.f32.mrb[0].mxu0
  %v314 = vadd.f32 %v209, %v313
  %v315 = vpop.f32.mrb[0].mxu0
  %316 = vmatprep.mubr.f32.mxu0 0.0
  %317 = vmatmul.mubr.f32.gmra.mrb[0].mxu0 %v109
  %v318 = vpop.f32.mrb[0].mxu0
  %v319 = vadd.f32 %v214, %v318
  %v320 = vpop.f32.mrb[0].mxu0
  %321 = vmatprep.mubr.f32.mxu0 0.0
  %322 = vmatmul.mubr.f32.gmra.mrb[0].mxu0 %v112
  %v323 = vpop.f32.mrb[0].mxu0
  %v324 = vadd.f32 %v219, %v323
  %v325 = vpop.f32.mrb[0].mxu0
  %326 = vmatprep.mubr.f32.mxu0 0.0
  %327 = vmatmul.mubr.f32.gmra.mrb[0].mxu0 %v115
  %v328 = vpop.f32.mrb[0].mxu0
  %v329 = vadd.f32 %v224, %v328
  %v330 = vpop.f32.mrb[0].mxu0
  %331 = vdwg.mxu0
  %vm332 = vcmask 785408
  %333 = vst.msk [vmem:[#allocation2] sm:$0xff] %vm332, %v294
  %334 = vst.msk [vmem:[#allocation2 + $0x8] sm:$0xff] %vm332, %v299
  %335 = vst.msk [vmem:[#allocation2 + $0x10] sm:$0xff] %vm332, %v304
  %336 = vst.msk [vmem:[#allocation2 + $0x18] sm:$0xff] %vm332, %v309
  %337 = vst.msk [vmem:[#allocation2 + $0x20] sm:$0xff] %vm332, %v314
  %338 = vst.msk [vmem:[#allocation2 + $0x28] sm:$0xff] %vm332, %v319
  %339 = vst.msk [vmem:[#allocation2 + $0x30] sm:$0xff] %vm332, %v324
  %340 = vst.msk [vmem:[#allocation2 + $0x38] sm:$0xff] %vm332, %v329
  %v341 = vld [vmem:[#allocation2] sm:$0xff]
  %vm342 = vcmask 261120
  %v344 = vsel %vm342, 0.0, 0
  %346 = vmatprep.subr.mxu0 0.0
  %347 = vmatpush1.msra.mxu0 %v80
  %348 = vmatprep.subr.mxu0 0.0
  %349 = vmatpush1.msra.mxu0 %v81
  %350 = vmatprep.subr.mxu0 0.0
  %351 = vmatpush1.msra.mxu0 %v82
  %352 = vmatprep.subr.mxu0 0.0
  %353 = vmatpush1.msra.mxu0 %v83
  %354 = vmatprep.subr.mxu0 0.0
  %355 = vmatpush1.msra.mxu0 0.0
  %356 = vmatprep.subr.mxu0 0.0
  %357 = vmatpush1.msra.mxu0 0.0
  %358 = vmatprep.subr.mxu0 0.0
  %359 = vmatpush1.msra.mxu0 0.0
  %360 = vmatprep.subr.mxu0 0.0
  %361 = vmatpush1.msra.mxu0 0.0
  %362 = vmatprep.subr.mxu0 0.0
  %363 = vmatpush1.msra.mxu0 0.0
  %364 = vmatprep.subr.mxu0 0.0
  %365 = vmatpush1.msra.mxu0 0.0
  %366 = vmatprep.subr.mxu0 0.0
  %367 = vmatpush1.msra.mxu0 0.0
  %368 = vmatprep.subr.mxu0 0.0
  %369 = vmatpush1.msra.mxu0 0.0
  %370 = vmatprep.subr.mxu0 0.0
  %371 = vmatpush1.msra.mxu0 0.0
  %372 = vmatprep.subr.mxu0 0.0
  %373 = vmatpush1.msra.mxu0 0.0
  %374 = vmatprep.subr.mxu0 0.0
  %375 = vmatpush1.msra.mxu0 0.0
  %376 = vmatprep.subr.mxu0 0.0
  %377 = vmatpush1.msra.mxu0 0.0
  %378 = vmatprep.subr.mxu0 0.0
  %379 = vmatpush1.msra.mxu0 0.0
  %380 = vmatprep.subr.mxu0 0.0
  %381 = vmatpush1.msra.mxu0 0.0
  %382 = vmatprep.subr.mxu0 0.0
  %383 = vmatpush1.msra.mxu0 0.0
  %384 = vmatprep.subr.mxu0 0.0
  %385 = vmatpush1.msra.mxu0 0.0
  %386 = vmatprep.subr.mxu0 0.0
  %387 = vmatpush1.msra.mxu0 0.0
  %388 = vmatprep.subr.mxu0 0.0
  %389 = vmatpush1.msra.mxu0 0.0
  %390 = vmatprep.subr.mxu0 0.0
  %391 = vmatpush1.msra.mxu0 0.0
  %392 = vmatprep.subr.mxu0 0.0
  %393 = vmatpush1.msra.mxu0 0.0
  %394 = vmatprep.subr.mxu0 0.0
  %395 = vmatpush1.msra.mxu0 0.0
  %396 = vmatprep.subr.mxu0 0.0
  %397 = vmatpush1.msra.mxu0 0.0
  %398 = vmatprep.subr.mxu0 0.0
  %399 = vmatpush1.msra.mxu0 0.0
  %400 = vmatprep.subr.mxu0 0.0
  %401 = vmatpush1.msra.mxu0 0.0
  %402 = vmatprep.subr.mxu0 0.0
  %403 = vmatpush1.msra.mxu0 0.0
  %404 = vmatprep.subr.mxu0 0.0
  %405 = vmatpush1.msra.mxu0 0.0
  %406 = vmatprep.subr.mxu0 0.0
  %407 = vmatpush1.msra.mxu0 0.0
  %408 = vmatprep.subr.mxu0 0.0
  %409 = vmatpush1.msra.mxu0 0.0
  %410 = vmatprep.mubr.f32.mxu0 0.0
  %411 = vmatmul.mubr.f32.gmra.mrb[0].mxu0 %v344
  %v412 = vpop.f32.mrb[0].mxu0
  %v413 = vadd.f32 %v90, %v412
  %v414 = vpop.f32.mrb[0].mxu0
  %415 = vdwg.mxu0
  %v416 = vadd.f32 %v341, %v413
  %v417 = vxor.u32 %v416, 2147483648
  %v418 = vmul.f32 %v417, 1.442695
  %v419 = vpow.pop %v418
  %v420 = vadd.f32 %v419, 1.0
  %v421 = vrcp.pop %v420
  %v422 = vmul.f32 1.0, %v421
  %424 = vrot.lane.b32.xlu0 %v413, 64
  %v425 = vpop.permute.xlu0 %424
  %v427 = vmul.f32 %v422, %v425
  %429 = vrot.lane.b32.xlu0 %v427, 64
  %v430 = vpop.permute.xlu0 %429
  %v432 = vadd.f32 %v341, %v430
  %v433 = vtanh.pop %v432
  %v434 = vsub.f32 1.0, %v422
  %436 = vrot.lane.b32.xlu0 %v433, 96
  %v437 = vpop.permute.xlu0 %436
  %v439 = vmul.f32 %v434, %v437
  %v440 = vmul.f32 %v422, 0.0
  %v441 = vadd.f32 %v439, %v440
  %443 = vrot.lane.b32.xlu0 %v441, 96
  %v444 = vpop.permute.xlu0 %443
  %446 = vst.msk [vmem:[#allocation3] sm:$0xff] %vm342, %v444
  %s447 = scalar_lea.vmem [#allocation2], 8
  %v448 = vld [vmem:[%s447] sm:$0xff]
  %v449 = vsel %vm342, %v444, 0
  %451 = vmatprep.subr.mxu0 0.0
  %452 = vmatpush1.msra.mxu0 %v80
  %453 = vmatprep.subr.mxu0 0.0
  %454 = vmatpush1.msra.mxu0 %v81
  %455 = vmatprep.subr.mxu0 0.0
  %456 = vmatpush1.msra.mxu0 %v82
  %457 = vmatprep.subr.mxu0 0.0
  %458 = vmatpush1.msra.mxu0 %v83
  %459 = vmatprep.subr.mxu0 0.0
  %460 = vmatpush1.msra.mxu0 0.0
  %461 = vmatprep.subr.mxu0 0.0
  %462 = vmatpush1.msra.mxu0 0.0
  %463 = vmatprep.subr.mxu0 0.0
  %464 = vmatpush1.msra.mxu0 0.0
  %465 = vmatprep.subr.mxu0 0.0
  %466 = vmatpush1.msra.mxu0 0.0
  %467 = vmatprep.subr.mxu0 0.0
  %468 = vmatpush1.msra.mxu0 0.0
  %469 = vmatprep.subr.mxu0 0.0
  %470 = vmatpush1.msra.mxu0 0.0
  %471 = vmatprep.subr.mxu0 0.0
  %472 = vmatpush1.msra.mxu0 0.0
  %473 = vmatprep.subr.mxu0 0.0
  %474 = vmatpush1.msra.mxu0 0.0
  %475 = vmatprep.subr.mxu0 0.0
  %476 = vmatpush1.msra.mxu0 0.0
  %477 = vmatprep.subr.mxu0 0.0
  %478 = vmatpush1.msra.mxu0 0.0
  %479 = vmatprep.subr.mxu0 0.0
  %480 = vmatpush1.msra.mxu0 0.0
  %481 = vmatprep.subr.mxu0 0.0
  %482 = vmatpush1.msra.mxu0 0.0
  %483 = vmatprep.subr.mxu0 0.0
  %484 = vmatpush1.msra.mxu0 0.0
  %485 = vmatprep.subr.mxu0 0.0
  %486 = vmatpush1.msra.mxu0 0.0
  %487 = vmatprep.subr.mxu0 0.0
  %488 = vmatpush1.msra.mxu0 0.0
  %489 = vmatprep.subr.mxu0 0.0
  %490 = vmatpush1.msra.mxu0 0.0
  %491 = vmatprep.subr.mxu0 0.0
  %492 = vmatpush1.msra.mxu0 0.0
  %493 = vmatprep.subr.mxu0 0.0
  %494 = vmatpush1.msra.mxu0 0.0
  %495 = vmatprep.subr.mxu0 0.0
  %496 = vmatpush1.msra.mxu0 0.0
  %497 = vmatprep.subr.mxu0 0.0
  %498 = vmatpush1.msra.mxu0 0.0
  %499 = vmatprep.subr.mxu0 0.0
  %500 = vmatpush1.msra.mxu0 0.0
  %501 = vmatprep.subr.mxu0 0.0
  %502 = vmatpush1.msra.mxu0 0.0
  %503 = vmatprep.subr.mxu0 0.0
  %504 = vmatpush1.msra.mxu0 0.0
  %505 = vmatprep.subr.mxu0 0.0
  %506 = vmatpush1.msra.mxu0 0.0
  %507 = vmatprep.subr.mxu0 0.0
  %508 = vmatpush1.msra.mxu0 0.0
  %509 = vmatprep.subr.mxu0 0.0
  %510 = vmatpush1.msra.mxu0 0.0
  %511 = vmatprep.subr.mxu0 0.0
  %512 = vmatpush1.msra.mxu0 0.0
  %513 = vmatprep.subr.mxu0 0.0
  %514 = vmatpush1.msra.mxu0 0.0
  %515 = vmatprep.mubr.f32.mxu0 0.0
  %516 = vmatmul.mubr.f32.gmra.mrb[0].mxu0 %v449
  %v517 = vpop.f32.mrb[0].mxu0
  %v518 = vadd.f32 %v90, %v517
  %v519 = vpop.f32.mrb[0].mxu0
  %520 = vdwg.mxu0
  %v521 = vadd.f32 %v448, %v518
  %v522 = vxor.u32 %v521, 2147483648
  %v523 = vmul.f32 %v522, 1.442695
  %v524 = vpow.pop %v523
  %v525 = vadd.f32 %v524, 1.0
  %v526 = vrcp.pop %v525
  %v527 = vmul.f32 1.0, %v526
  %529 = vrot.lane.b32.xlu0 %v518, 64
  %v530 = vpop.permute.xlu0 %529
  %v532 = vmul.f32 %v527, %v530
  %534 = vrot.lane.b32.xlu0 %v532, 64
  %v535 = vpop.permute.xlu0 %534
  %v537 = vadd.f32 %v448, %v535
  %v538 = vtanh.pop %v537
  %v539 = vsub.f32 1.0, %v527
  %541 = vrot.lane.b32.xlu0 %v538, 96
  %v542 = vpop.permute.xlu0 %541
  %v544 = vmul.f32 %v539, %v542
  %v545 = vmul.f32 %v527, %v441
  %v546 = vadd.f32 %v544, %v545
  %548 = vrot.lane.b32.xlu0 %v546, 96
  %v549 = vpop.permute.xlu0 %548
  %s551 = scalar_lea.vmem [#allocation3], 8
  %552 = vst.msk [vmem:[%s551] sm:$0xff] %vm342, %v549
  %s553 = scalar_lea.vmem [#allocation2], 16
  %v554 = vld [vmem:[%s553] sm:$0xff]
  %v555 = vsel %vm342, %v549, 0
  %557 = vmatprep.subr.mxu0 0.0
  %558 = vmatpush1.msra.mxu0 %v80
  %559 = vmatprep.subr.mxu0 0.0
  %560 = vmatpush1.msra.mxu0 %v81
  %561 = vmatprep.subr.mxu0 0.0
  %562 = vmatpush1.msra.mxu0 %v82
  %563 = vmatprep.subr.mxu0 0.0
  %564 = vmatpush1.msra.mxu0 %v83
  %565 = vmatprep.subr.mxu0 0.0
  %566 = vmatpush1.msra.mxu0 0.0
  %567 = vmatprep.subr.mxu0 0.0
  %568 = vmatpush1.msra.mxu0 0.0
  %569 = vmatprep.subr.mxu0 0.0
  %570 = vmatpush1.msra.mxu0 0.0
  %571 = vmatprep.subr.mxu0 0.0
  %572 = vmatpush1.msra.mxu0 0.0
  %573 = vmatprep.subr.mxu0 0.0
  %574 = vmatpush1.msra.mxu0 0.0
  %575 = vmatprep.subr.mxu0 0.0
  %576 = vmatpush1.msra.mxu0 0.0
  %577 = vmatprep.subr.mxu0 0.0
  %578 = vmatpush1.msra.mxu0 0.0
  %579 = vmatprep.subr.mxu0 0.0
  %580 = vmatpush1.msra.mxu0 0.0
  %581 = vmatprep.subr.mxu0 0.0
  %582 = vmatpush1.msra.mxu0 0.0
  %583 = vmatprep.subr.mxu0 0.0
  %584 = vmatpush1.msra.mxu0 0.0
  %585 = vmatprep.subr.mxu0 0.0
  %586 = vmatpush1.msra.mxu0 0.0
  %587 = vmatprep.subr.mxu0 0.0
  %588 = vmatpush1.msra.mxu0 0.0
  %589 = vmatprep.subr.mxu0 0.0
  %590 = vmatpush1.msra.mxu0 0.0
  %591 = vmatprep.subr.mxu0 0.0
  %592 = vmatpush1.msra.mxu0 0.0
  %593 = vmatprep.subr.mxu0 0.0
  %594 = vmatpush1.msra.mxu0 0.0
  %595 = vmatprep.subr.mxu0 0.0
  %596 = vmatpush1.msra.mxu0 0.0
  %597 = vmatprep.subr.mxu0 0.0
  %598 = vmatpush1.msra.mxu0 0.0
  %599 = vmatprep.subr.mxu0 0.0
  %600 = vmatpush1.msra.mxu0 0.0
  %601 = vmatprep.subr.mxu0 0.0
  %602 = vmatpush1.msra.mxu0 0.0
  %603 = vmatprep.subr.mxu0 0.0
  %604 = vmatpush1.msra.mxu0 0.0
  %605 = vmatprep.subr.mxu0 0.0
  %606 = vmatpush1.msra.mxu0 0.0
  %607 = vmatprep.subr.mxu0 0.0
  %608 = vmatpush1.msra.mxu0 0.0
  %609 = vmatprep.subr.mxu0 0.0
  %610 = vmatpush1.msra.mxu0 0.0
  %611 = vmatprep.subr.mxu0 0.0
  %612 = vmatpush1.msra.mxu0 0.0
  %613 = vmatprep.subr.mxu0 0.0
  %614 = vmatpush1.msra.mxu0 0.0
  %615 = vmatprep.subr.mxu0 0.0
  %616 = vmatpush1.msra.mxu0 0.0
  %617 = vmatprep.subr.mxu0 0.0
  %618 = vmatpush1.msra.mxu0 0.0
  %619 = vmatprep.subr.mxu0 0.0
  %620 = vmatpush1.msra.mxu0 0.0
  %621 = vmatprep.mubr.f32.mxu0 0.0
  %622 = vmatmul.mubr.f32.gmra.mrb[0].mxu0 %v555
  %v623 = vpop.f32.mrb[0].mxu0
  %v624 = vadd.f32 %v90, %v623
  %v625 = vpop.f32.mrb[0].mxu0
  %626 = vdwg.mxu0
  %v627 = vadd.f32 %v554, %v624
  %v628 = vxor.u32 %v627, 2147483648
  %v629 = vmul.f32 %v628, 1.442695
  %v630 = vpow.pop %v629
  %v631 = vadd.f32 %v630, 1.0
  %v632 = vrcp.pop %v631
  %v633 = vmul.f32 1.0, %v632
  %635 = vrot.lane.b32.xlu0 %v624, 64
  %v636 = vpop.permute.xlu0 %635
  %v638 = vmul.f32 %v633, %v636
  %640 = vrot.lane.b32.xlu0 %v638, 64
  %v641 = vpop.permute.xlu0 %640
  %v643 = vadd.f32 %v554, %v641
  %v644 = vtanh.pop %v643
  %v645 = vsub.f32 1.0, %v633
  %647 = vrot.lane.b32.xlu0 %v644, 96
  %v648 = vpop.permute.xlu0 %647
  %v650 = vmul.f32 %v645, %v648
  %v651 = vmul.f32 %v633, %v546
  %v652 = vadd.f32 %v650, %v651
  %654 = vrot.lane.b32.xlu0 %v652, 96
  %v655 = vpop.permute.xlu0 %654
  %s657 = scalar_lea.vmem [#allocation3], 16
  %658 = vst.msk [vmem:[%s657] sm:$0xff] %vm342, %v655
  %s659 = scalar_lea.vmem [#allocation2], 24
  %v660 = vld [vmem:[%s659] sm:$0xff]
  %v661 = vsel %vm342, %v655, 0
  %663 = vmatprep.subr.mxu0 0.0
  %664 = vmatpush1.msra.mxu0 %v80
  %665 = vmatprep.subr.mxu0 0.0
  %666 = vmatpush1.msra.mxu0 %v81
  %667 = vmatprep.subr.mxu0 0.0
  %668 = vmatpush1.msra.mxu0 %v82
  %669 = vmatprep.subr.mxu0 0.0
  %670 = vmatpush1.msra.mxu0 %v83
  %671 = vmatprep.subr.mxu0 0.0
  %672 = vmatpush1.msra.mxu0 0.0
  %673 = vmatprep.subr.mxu0 0.0
  %674 = vmatpush1.msra.mxu0 0.0
  %675 = vmatprep.subr.mxu0 0.0
  %676 = vmatpush1.msra.mxu0 0.0
  %677 = vmatprep.subr.mxu0 0.0
  %678 = vmatpush1.msra.mxu0 0.0
  %679 = vmatprep.subr.mxu0 0.0
  %680 = vmatpush1.msra.mxu0 0.0
  %681 = vmatprep.subr.mxu0 0.0
  %682 = vmatpush1.msra.mxu0 0.0
  %683 = vmatprep.subr.mxu0 0.0
  %684 = vmatpush1.msra.mxu0 0.0
  %685 = vmatprep.subr.mxu0 0.0
  %686 = vmatpush1.msra.mxu0 0.0
  %687 = vmatprep.subr.mxu0 0.0
  %688 = vmatpush1.msra.mxu0 0.0
  %689 = vmatprep.subr.mxu0 0.0
  %690 = vmatpush1.msra.mxu0 0.0
  %691 = vmatprep.subr.mxu0 0.0
  %692 = vmatpush1.msra.mxu0 0.0
  %693 = vmatprep.subr.mxu0 0.0
  %694 = vmatpush1.msra.mxu0 0.0
  %695 = vmatprep.subr.mxu0 0.0
  %696 = vmatpush1.msra.mxu0 0.0
  %697 = vmatprep.subr.mxu0 0.0
  %698 = vmatpush1.msra.mxu0 0.0
  %699 = vmatprep.subr.mxu0 0.0
  %700 = vmatpush1.msra.mxu0 0.0
  %701 = vmatprep.subr.mxu0 0.0
  %702 = vmatpush1.msra.mxu0 0.0
  %703 = vmatprep.subr.mxu0 0.0
  %704 = vmatpush1.msra.mxu0 0.0
  %705 = vmatprep.subr.mxu0 0.0
  %706 = vmatpush1.msra.mxu0 0.0
  %707 = vmatprep.subr.mxu0 0.0
  %708 = vmatpush1.msra.mxu0 0.0
  %709 = vmatprep.subr.mxu0 0.0
  %710 = vmatpush1.msra.mxu0 0.0
  %711 = vmatprep.subr.mxu0 0.0
  %712 = vmatpush1.msra.mxu0 0.0
  %713 = vmatprep.subr.mxu0 0.0
  %714 = vmatpush1.msra.mxu0 0.0
  %715 = vmatprep.subr.mxu0 0.0
  %716 = vmatpush1.msra.mxu0 0.0
  %717 = vmatprep.subr.mxu0 0.0
  %718 = vmatpush1.msra.mxu0 0.0
  %719 = vmatprep.subr.mxu0 0.0
  %720 = vmatpush1.msra.mxu0 0.0
  %721 = vmatprep.subr.mxu0 0.0
  %722 = vmatpush1.msra.mxu0 0.0
  %723 = vmatprep.subr.mxu0 0.0
  %724 = vmatpush1.msra.mxu0 0.0
  %725 = vmatprep.subr.mxu0 0.0
  %726 = vmatpush1.msra.mxu0 0.0
  %727 = vmatprep.mubr.f32.mxu0 0.0
  %728 = vmatmul.mubr.f32.gmra.mrb[0].mxu0 %v661
  %v729 = vpop.f32.mrb[0].mxu0
  %v730 = vadd.f32 %v90, %v729
  %v731 = vpop.f32.mrb[0].mxu0
  %732 = vdwg.mxu0
  %v733 = vadd.f32 %v660, %v730
  %v734 = vxor.u32 %v733, 2147483648
  %v735 = vmul.f32 %v734, 1.442695
  %v736 = vpow.pop %v735
  %v737 = vadd.f32 %v736, 1.0
  %v738 = vrcp.pop %v737
  %v739 = vmul.f32 1.0, %v738
  %741 = vrot.lane.b32.xlu0 %v730, 64
  %v742 = vpop.permute.xlu0 %741
  %v744 = vmul.f32 %v739, %v742
  %746 = vrot.lane.b32.xlu0 %v744, 64
  %v747 = vpop.permute.xlu0 %746
  %v749 = vadd.f32 %v660, %v747
  %v750 = vtanh.pop %v749
  %v751 = vsub.f32 1.0, %v739
  %753 = vrot.lane.b32.xlu0 %v750, 96
  %v754 = vpop.permute.xlu0 %753
  %v756 = vmul.f32 %v751, %v754
  %v757 = vmul.f32 %v739, %v652
  %v758 = vadd.f32 %v756, %v757
  %760 = vrot.lane.b32.xlu0 %v758, 96
  %v761 = vpop.permute.xlu0 %760
  %s763 = scalar_lea.vmem [#allocation3], 24
  %764 = vst.msk [vmem:[%s763] sm:$0xff] %vm342, %v761
  %s765 = scalar_lea.vmem [#allocation2], 32
  %v766 = vld [vmem:[%s765] sm:$0xff]
  %v767 = vsel %vm342, %v761, 0
  %769 = vmatprep.subr.mxu0 0.0
  %770 = vmatpush1.msra.mxu0 %v80
  %771 = vmatprep.subr.mxu0 0.0
  %772 = vmatpush1.msra.mxu0 %v81
  %773 = vmatprep.subr.mxu0 0.0
  %774 = vmatpush1.msra.mxu0 %v82
  %775 = vmatprep.subr.mxu0 0.0
  %776 = vmatpush1.msra.mxu0 %v83
  %777 = vmatprep.subr.mxu0 0.0
  %778 = vmatpush1.msra.mxu0 0.0
  %779 = vmatprep.subr.mxu0 0.0
  %780 = vmatpush1.msra.mxu0 0.0
  %781 = vmatprep.subr.mxu0 0.0
  %782 = vmatpush1.msra.mxu0 0.0
  %783 = vmatprep.subr.mxu0 0.0
  %784 = vmatpush1.msra.mxu0 0.0
  %785 = vmatprep.subr.mxu0 0.0
  %786 = vmatpush1.msra.mxu0 0.0
  %787 = vmatprep.subr.mxu0 0.0
  %788 = vmatpush1.msra.mxu0 0.0
  %789 = vmatprep.subr.mxu0 0.0
  %790 = vmatpush1.msra.mxu0 0.0
  %791 = vmatprep.subr.mxu0 0.0
  %792 = vmatpush1.msra.mxu0 0.0
  %793 = vmatprep.subr.mxu0 0.0
  %794 = vmatpush1.msra.mxu0 0.0
  %795 = vmatprep.subr.mxu0 0.0
  %796 = vmatpush1.msra.mxu0 0.0
  %797 = vmatprep.subr.mxu0 0.0
  %798 = vmatpush1.msra.mxu0 0.0
  %799 = vmatprep.subr.mxu0 0.0
  %800 = vmatpush1.msra.mxu0 0.0
  %801 = vmatprep.subr.mxu0 0.0
  %802 = vmatpush1.msra.mxu0 0.0
  %803 = vmatprep.subr.mxu0 0.0
  %804 = vmatpush1.msra.mxu0 0.0
  %805 = vmatprep.subr.mxu0 0.0
  %806 = vmatpush1.msra.mxu0 0.0
  %807 = vmatprep.subr.mxu0 0.0
  %808 = vmatpush1.msra.mxu0 0.0
  %809 = vmatprep.subr.mxu0 0.0
  %810 = vmatpush1.msra.mxu0 0.0
  %811 = vmatprep.subr.mxu0 0.0
  %812 = vmatpush1.msra.mxu0 0.0
  %813 = vmatprep.subr.mxu0 0.0
  %814 = vmatpush1.msra.mxu0 0.0
  %815 = vmatprep.subr.mxu0 0.0
  %816 = vmatpush1.msra.mxu0 0.0
  %817 = vmatprep.subr.mxu0 0.0
  %818 = vmatpush1.msra.mxu0 0.0
  %819 = vmatprep.subr.mxu0 0.0
  %820 = vmatpush1.msra.mxu0 0.0
  %821 = vmatprep.subr.mxu0 0.0
  %822 = vmatpush1.msra.mxu0 0.0
  %823 = vmatprep.subr.mxu0 0.0
  %824 = vmatpush1.msra.mxu0 0.0
  %825 = vmatprep.subr.mxu0 0.0
  %826 = vmatpush1.msra.mxu0 0.0
  %827 = vmatprep.subr.mxu0 0.0
  %828 = vmatpush1.msra.mxu0 0.0
  %829 = vmatprep.subr.mxu0 0.0
  %830 = vmatpush1.msra.mxu0 0.0
  %831 = vmatprep.subr.mxu0 0.0
  %832 = vmatpush1.msra.mxu0 0.0
  %833 = vmatprep.mubr.f32.mxu0 0.0
  %834 = vmatmul.mubr.f32.gmra.mrb[0].mxu0 %v767
  %v835 = vpop.f32.mrb[0].mxu0
  %v836 = vadd.f32 %v90, %v835
  %v837 = vpop.f32.mrb[0].mxu0
  %838 = vdwg.mxu0
  %v839 = vadd.f32 %v766, %v836
  %v840 = vxor.u32 %v839, 2147483648
  %v841 = vmul.f32 %v840, 1.442695
  %v842 = vpow.pop %v841
  %v843 = vadd.f32 %v842, 1.0
  %v844 = vrcp.pop %v843
  %v845 = vmul.f32 1.0, %v844
  %847 = vrot.lane.b32.xlu0 %v836, 64
  %v848 = vpop.permute.xlu0 %847
  %v850 = vmul.f32 %v845, %v848
  %852 = vrot.lane.b32.xlu0 %v850, 64
  %v853 = vpop.permute.xlu0 %852
  %v855 = vadd.f32 %v766, %v853
  %v856 = vtanh.pop %v855
  %v857 = vsub.f32 1.0, %v845
  %859 = vrot.lane.b32.xlu0 %v856, 96
  %v860 = vpop.permute.xlu0 %859
  %v862 = vmul.f32 %v857, %v860
  %v863 = vmul.f32 %v845, %v758
  %v864 = vadd.f32 %v862, %v863
  %866 = vrot.lane.b32.xlu0 %v864, 96
  %v867 = vpop.permute.xlu0 %866
  %s869 = scalar_lea.vmem [#allocation3], 32
  %870 = vst.msk [vmem:[%s869] sm:$0xff] %vm342, %v867
  %s871 = scalar_lea.vmem [#allocation2], 40
  %v872 = vld [vmem:[%s871] sm:$0xff]
  %v873 = vsel %vm342, %v867, 0
  %875 = vmatprep.subr.mxu0 0.0
  %876 = vmatpush1.msra.mxu0 %v80
  %877 = vmatprep.subr.mxu0 0.0
  %878 = vmatpush1.msra.mxu0 %v81
  %879 = vmatprep.subr.mxu0 0.0
  %880 = vmatpush1.msra.mxu0 %v82
  %881 = vmatprep.subr.mxu0 0.0
  %882 = vmatpush1.msra.mxu0 %v83
  %883 = vmatprep.subr.mxu0 0.0
  %884 = vmatpush1.msra.mxu0 0.0
  %885 = vmatprep.subr.mxu0 0.0
  %886 = vmatpush1.msra.mxu0 0.0
  %887 = vmatprep.subr.mxu0 0.0
  %888 = vmatpush1.msra.mxu0 0.0
  %889 = vmatprep.subr.mxu0 0.0
  %890 = vmatpush1.msra.mxu0 0.0
  %891 = vmatprep.subr.mxu0 0.0
  %892 = vmatpush1.msra.mxu0 0.0
  %893 = vmatprep.subr.mxu0 0.0
  %894 = vmatpush1.msra.mxu0 0.0
  %895 = vmatprep.subr.mxu0 0.0
  %896 = vmatpush1.msra.mxu0 0.0
  %897 = vmatprep.subr.mxu0 0.0
  %898 = vmatpush1.msra.mxu0 0.0
  %899 = vmatprep.subr.mxu0 0.0
  %900 = vmatpush1.msra.mxu0 0.0
  %901 = vmatprep.subr.mxu0 0.0
  %902 = vmatpush1.msra.mxu0 0.0
  %903 = vmatprep.subr.mxu0 0.0
  %904 = vmatpush1.msra.mxu0 0.0
  %905 = vmatprep.subr.mxu0 0.0
  %906 = vmatpush1.msra.mxu0 0.0
  %907 = vmatprep.subr.mxu0 0.0
  %908 = vmatpush1.msra.mxu0 0.0
  %909 = vmatprep.subr.mxu0 0.0
  %910 = vmatpush1.msra.mxu0 0.0
  %911 = vmatprep.subr.mxu0 0.0
  %912 = vmatpush1.msra.mxu0 0.0
  %913 = vmatprep.subr.mxu0 0.0
  %914 = vmatpush1.msra.mxu0 0.0
  %915 = vmatprep.subr.mxu0 0.0
  %916 = vmatpush1.msra.mxu0 0.0
  %917 = vmatprep.subr.mxu0 0.0
  %918 = vmatpush1.msra.mxu0 0.0
  %919 = vmatprep.subr.mxu0 0.0
  %920 = vmatpush1.msra.mxu0 0.0
  %921 = vmatprep.subr.mxu0 0.0
  %922 = vmatpush1.msra.mxu0 0.0
  %923 = vmatprep.subr.mxu0 0.0
  %924 = vmatpush1.msra.mxu0 0.0
  %925 = vmatprep.subr.mxu0 0.0
  %926 = vmatpush1.msra.mxu0 0.0
  %927 = vmatprep.subr.mxu0 0.0
  %928 = vmatpush1.msra.mxu0 0.0
  %929 = vmatprep.subr.mxu0 0.0
  %930 = vmatpush1.msra.mxu0 0.0
  %931 = vmatprep.subr.mxu0 0.0
  %932 = vmatpush1.msra.mxu0 0.0
  %933 = vmatprep.subr.mxu0 0.0
  %934 = vmatpush1.msra.mxu0 0.0
  %935 = vmatprep.subr.mxu0 0.0
  %936 = vmatpush1.msra.mxu0 0.0
  %937 = vmatprep.subr.mxu0 0.0
  %938 = vmatpush1.msra.mxu0 0.0
  %939 = vmatprep.mubr.f32.mxu0 0.0
  %940 = vmatmul.mubr.f32.gmra.mrb[0].mxu0 %v873
  %v941 = vpop.f32.mrb[0].mxu0
  %v942 = vadd.f32 %v90, %v941
  %v943 = vpop.f32.mrb[0].mxu0
  %944 = vdwg.mxu0
  %v945 = vadd.f32 %v872, %v942
  %v946 = vxor.u32 %v945, 2147483648
  %v947 = vmul.f32 %v946, 1.442695
  %v948 = vpow.pop %v947
  %v949 = vadd.f32 %v948, 1.0
  %v950 = vrcp.pop %v949
  %v951 = vmul.f32 1.0, %v950
  %953 = vrot.lane.b32.xlu0 %v942, 64
  %v954 = vpop.permute.xlu0 %953
  %v956 = vmul.f32 %v951, %v954
  %958 = vrot.lane.b32.xlu0 %v956, 64
  %v959 = vpop.permute.xlu0 %958
  %v961 = vadd.f32 %v872, %v959
  %v962 = vtanh.pop %v961
  %v963 = vsub.f32 1.0, %v951
  %965 = vrot.lane.b32.xlu0 %v962, 96
  %v966 = vpop.permute.xlu0 %965
  %v968 = vmul.f32 %v963, %v966
  %v969 = vmul.f32 %v951, %v864
  %v970 = vadd.f32 %v968, %v969
  %972 = vrot.lane.b32.xlu0 %v970, 96
  %v973 = vpop.permute.xlu0 %972
  %s975 = scalar_lea.vmem [#allocation3], 40
  %976 = vst.msk [vmem:[%s975] sm:$0xff] %vm342, %v973
  %s977 = scalar_lea.vmem [#allocation2], 48
  %v978 = vld [vmem:[%s977] sm:$0xff]
  %v979 = vsel %vm342, %v973, 0
  %981 = vmatprep.subr.mxu0 0.0
  %982 = vmatpush1.msra.mxu0 %v80
  %983 = vmatprep.subr.mxu0 0.0
  %984 = vmatpush1.msra.mxu0 %v81
  %985 = vmatprep.subr.mxu0 0.0
  %986 = vmatpush1.msra.mxu0 %v82
  %987 = vmatprep.subr.mxu0 0.0
  %988 = vmatpush1.msra.mxu0 %v83
  %989 = vmatprep.subr.mxu0 0.0
  %990 = vmatpush1.msra.mxu0 0.0
  %991 = vmatprep.subr.mxu0 0.0
  %992 = vmatpush1.msra.mxu0 0.0
  %993 = vmatprep.subr.mxu0 0.0
  %994 = vmatpush1.msra.mxu0 0.0
  %995 = vmatprep.subr.mxu0 0.0
  %996 = vmatpush1.msra.mxu0 0.0
  %997 = vmatprep.subr.mxu0 0.0
  %998 = vmatpush1.msra.mxu0 0.0
  %999 = vmatprep.subr.mxu0 0.0
  %1000 = vmatpush1.msra.mxu0 0.0
  %1001 = vmatprep.subr.mxu0 0.0
  %1002 = vmatpush1.msra.mxu0 0.0
  %1003 = vmatprep.subr.mxu0 0.0
  %1004 = vmatpush1.msra.mxu0 0.0
  %1005 = vmatprep.subr.mxu0 0.0
  %1006 = vmatpush1.msra.mxu0 0.0
  %1007 = vmatprep.subr.mxu0 0.0
  %1008 = vmatpush1.msra.mxu0 0.0
  %1009 = vmatprep.subr.mxu0 0.0
  %1010 = vmatpush1.msra.mxu0 0.0
  %1011 = vmatprep.subr.mxu0 0.0
  %1012 = vmatpush1.msra.mxu0 0.0
  %1013 = vmatprep.subr.mxu0 0.0
  %1014 = vmatpush1.msra.mxu0 0.0
  %1015 = vmatprep.subr.mxu0 0.0
  %1016 = vmatpush1.msra.mxu0 0.0
  %1017 = vmatprep.subr.mxu0 0.0
  %1018 = vmatpush1.msra.mxu0 0.0
  %1019 = vmatprep.subr.mxu0 0.0
  %1020 = vmatpush1.msra.mxu0 0.0
  %1021 = vmatprep.subr.mxu0 0.0
  %1022 = vmatpush1.msra.mxu0 0.0
  %1023 = vmatprep.subr.mxu0 0.0
  %1024 = vmatpush1.msra.mxu0 0.0
  %1025 = vmatprep.subr.mxu0 0.0
  %1026 = vmatpush1.msra.mxu0 0.0
  %1027 = vmatprep.subr.mxu0 0.0
  %1028 = vmatpush1.msra.mxu0 0.0
  %1029 = vmatprep.subr.mxu0 0.0
  %1030 = vmatpush1.msra.mxu0 0.0
  %1031 = vmatprep.subr.mxu0 0.0
  %1032 = vmatpush1.msra.mxu0 0.0
  %1033 = vmatprep.subr.mxu0 0.0
  %1034 = vmatpush1.msra.mxu0 0.0
  %1035 = vmatprep.subr.mxu0 0.0
  %1036 = vmatpush1.msra.mxu0 0.0
  %1037 = vmatprep.subr.mxu0 0.0
  %1038 = vmatpush1.msra.mxu0 0.0
  %1039 = vmatprep.subr.mxu0 0.0
  %1040 = vmatpush1.msra.mxu0 0.0
  %1041 = vmatprep.subr.mxu0 0.0
  %1042 = vmatpush1.msra.mxu0 0.0
  %1043 = vmatprep.subr.mxu0 0.0
  %1044 = vmatpush1.msra.mxu0 0.0
  %1045 = vmatprep.mubr.f32.mxu0 0.0
  %1046 = vmatmul.mubr.f32.gmra.mrb[0].mxu0 %v979
  %v1047 = vpop.f32.mrb[0].mxu0
  %v1048 = vadd.f32 %v90, %v1047
  %v1049 = vpop.f32.mrb[0].mxu0
  %1050 = vdwg.mxu0
  %v1051 = vadd.f32 %v978, %v1048
  %v1052 = vxor.u32 %v1051, 2147483648
  %v1053 = vmul.f32 %v1052, 1.442695
  %v1054 = vpow.pop %v1053
  %v1055 = vadd.f32 %v1054, 1.0
  %v1056 = vrcp.pop %v1055
  %v1057 = vmul.f32 1.0, %v1056
  %1059 = vrot.lane.b32.xlu0 %v1048, 64
  %v1060 = vpop.permute.xlu0 %1059
  %v1062 = vmul.f32 %v1057, %v1060
  %1064 = vrot.lane.b32.xlu0 %v1062, 64
  %v1065 = vpop.permute.xlu0 %1064
  %v1067 = vadd.f32 %v978, %v1065
  %v1068 = vtanh.pop %v1067
  %v1069 = vsub.f32 1.0, %v1057
  %1071 = vrot.lane.b32.xlu0 %v1068, 96
  %v1072 = vpop.permute.xlu0 %1071
  %v1074 = vmul.f32 %v1069, %v1072
  %v1075 = vmul.f32 %v1057, %v970
  %v1076 = vadd.f32 %v1074, %v1075
  %1078 = vrot.lane.b32.xlu0 %v1076, 96
  %v1079 = vpop.permute.xlu0 %1078
  %s1081 = scalar_lea.vmem [#allocation3], 48
  %1082 = vst.msk [vmem:[%s1081] sm:$0xff] %vm342, %v1079
  %s1083 = scalar_lea.vmem [#allocation2], 56
  %v1084 = vld [vmem:[%s1083] sm:$0xff]
  %v1085 = vsel %vm342, %v1079, 0
  %1087 = vmatprep.subr.mxu0 0.0
  %1088 = vmatpush1.msra.mxu0 %v80
  %1089 = vmatprep.subr.mxu0 0.0
  %1090 = vmatpush1.msra.mxu0 %v81
  %1091 = vmatprep.subr.mxu0 0.0
  %1092 = vmatpush1.msra.mxu0 %v82
  %1093 = vmatprep.subr.mxu0 0.0
  %1094 = vmatpush1.msra.mxu0 %v83
  %1095 = vmatprep.subr.mxu0 0.0
  %1096 = vmatpush1.msra.mxu0 0.0
  %1097 = vmatprep.subr.mxu0 0.0
  %1098 = vmatpush1.msra.mxu0 0.0
  %1099 = vmatprep.subr.mxu0 0.0
  %1100 = vmatpush1.msra.mxu0 0.0
  %1101 = vmatprep.subr.mxu0 0.0
  %1102 = vmatpush1.msra.mxu0 0.0
  %1103 = vmatprep.subr.mxu0 0.0
  %1104 = vmatpush1.msra.mxu0 0.0
  %1105 = vmatprep.subr.mxu0 0.0
  %1106 = vmatpush1.msra.mxu0 0.0
  %1107 = vmatprep.subr.mxu0 0.0
  %1108 = vmatpush1.msra.mxu0 0.0
  %1109 = vmatprep.subr.mxu0 0.0
  %1110 = vmatpush1.msra.mxu0 0.0
  %1111 = vmatprep.subr.mxu0 0.0
  %1112 = vmatpush1.msra.mxu0 0.0
  %1113 = vmatprep.subr.mxu0 0.0
  %1114 = vmatpush1.msra.mxu0 0.0
  %1115 = vmatprep.subr.mxu0 0.0
  %1116 = vmatpush1.msra.mxu0 0.0
  %1117 = vmatprep.subr.mxu0 0.0
  %1118 = vmatpush1.msra.mxu0 0.0
  %1119 = vmatprep.subr.mxu0 0.0
  %1120 = vmatpush1.msra.mxu0 0.0
  %1121 = vmatprep.subr.mxu0 0.0
  %1122 = vmatpush1.msra.mxu0 0.0
  %1123 = vmatprep.subr.mxu0 0.0
  %1124 = vmatpush1.msra.mxu0 0.0
  %1125 = vmatprep.subr.mxu0 0.0
  %1126 = vmatpush1.msra.mxu0 0.0
  %1127 = vmatprep.subr.mxu0 0.0
  %1128 = vmatpush1.msra.mxu0 0.0
  %1129 = vmatprep.subr.mxu0 0.0
  %1130 = vmatpush1.msra.mxu0 0.0
  %1131 = vmatprep.subr.mxu0 0.0
  %1132 = vmatpush1.msra.mxu0 0.0
  %1133 = vmatprep.subr.mxu0 0.0
  %1134 = vmatpush1.msra.mxu0 0.0
  %1135 = vmatprep.subr.mxu0 0.0
  %1136 = vmatpush1.msra.mxu0 0.0
  %1137 = vmatprep.subr.mxu0 0.0
  %1138 = vmatpush1.msra.mxu0 0.0
  %1139 = vmatprep.subr.mxu0 0.0
  %1140 = vmatpush1.msra.mxu0 0.0
  %1141 = vmatprep.subr.mxu0 0.0
  %1142 = vmatpush1.msra.mxu0 0.0
  %1143 = vmatprep.subr.mxu0 0.0
  %1144 = vmatpush1.msra.mxu0 0.0
  %1145 = vmatprep.subr.mxu0 0.0
  %1146 = vmatpush1.msra.mxu0 0.0
  %1147 = vmatprep.subr.mxu0 0.0
  %1148 = vmatpush1.msra.mxu0 0.0
  %1149 = vmatprep.subr.mxu0 0.0
  %1150 = vmatpush1.msra.mxu0 0.0
  %1151 = vmatprep.mubr.f32.mxu0 0.0
  %1152 = vmatmul.mubr.f32.gmra.mrb[0].mxu0 %v1085
  %v1153 = vpop.f32.mrb[0].mxu0
  %v1154 = vadd.f32 %v90, %v1153
  %v1155 = vpop.f32.mrb[0].mxu0
  %1156 = vdwg.mxu0
  %v1157 = vadd.f32 %v1084, %v1154
  %v1158 = vxor.u32 %v1157, 2147483648
  %v1159 = vmul.f32 %v1158, 1.442695
  %v1160 = vpow.pop %v1159
  %v1161 = vadd.f32 %v1160, 1.0
  %v1162 = vrcp.pop %v1161
  %v1163 = vmul.f32 1.0, %v1162
  %1165 = vrot.lane.b32.xlu0 %v1154, 64
  %v1166 = vpop.permute.xlu0 %1165
  %v1168 = vmul.f32 %v1163, %v1166
  %1170 = vrot.lane.b32.xlu0 %v1168, 64
  %v1171 = vpop.permute.xlu0 %1170
  %v1173 = vadd.f32 %v1084, %v1171
  %v1174 = vtanh.pop %v1173
  %v1175 = vsub.f32 1.0, %v1163
  %1177 = vrot.lane.b32.xlu0 %v1174, 96
  %v1178 = vpop.permute.xlu0 %1177
  %v1180 = vmul.f32 %v1175, %v1178
  %v1181 = vmul.f32 %v1163, %v1076
  %v1182 = vadd.f32 %v1180, %v1181
  %1184 = vrot.lane.b32.xlu0 %v1182, 96
  %v1185 = vpop.permute.xlu0 %1184
  %s1187 = scalar_lea.vmem [#allocation3], 56
  %1188 = vst.msk [vmem:[%s1187] sm:$0xff] %vm342, %v1185
  %v1189 = vld [vmem:[%s5] sm:$0xff]
  %v1190 = vld [vmem:[%s5 + $0x8] sm:$0xff]
  %v1191 = vld [vmem:[%s5 + $0x10] sm:$0xff]
  %v1192 = vld [vmem:[%s5 + $0x18] sm:$0xff]
  %v1193 = vld [vmem:[%s6] sm:$0xff]
  %v1194 = vld [vmem:[%s6 + $0x8] sm:$0xff]
  %v1195 = vld [vmem:[%s6 + $0x10] sm:$0xff]
  %v1196 = vld [vmem:[%s6 + $0x18] sm:$0xff]
  %v1197 = vld [vmem:[%s7] sm:$0x1]
  %v1198 = vld [vmem:[%s8] sm:$0x1]
  %v1200 = vlaneseq
  %v1201 = vshrl.u32 %v1200, 7
  %v1202 = vsub.s32 0, %v1201
  %v1203 = vrot.slane %v1198, %v1202
  %v1205 = vld [vmem:[#allocation3] sm:$0xff]
  %v1206 = vld [vmem:[#allocation3 + $0x8] sm:$0xff]
  %v1207 = vld [vmem:[#allocation3 + $0x10] sm:$0xff]
  %v1208 = vld [vmem:[#allocation3 + $0x18] sm:$0xff]
  %v1209 = vld [vmem:[#allocation3 + $0x20] sm:$0xff]
  %v1210 = vld [vmem:[#allocation3 + $0x28] sm:$0xff]
  %v1211 = vld [vmem:[#allocation3 + $0x30] sm:$0xff]
  %v1212 = vld [vmem:[#allocation3 + $0x38] sm:$0xff]
  %v1214 = vlaneseq
  %v1215 = vshrl.u32 %v1214, 7
  %v1216 = vsub.s32 0, %v1215
  %v1217 = vrot.slane %v1197, %v1216
  %v1220 = vsel %vm342, %v1205, 0
  %v1223 = vsel %vm342, %v1206, 0
  %v1226 = vsel %vm342, %v1207, 0
  %v1229 = vsel %vm342, %v1208, 0
  %v1232 = vsel %vm342, %v1209, 0
  %v1235 = vsel %vm342, %v1210, 0
  %v1238 = vsel %vm342, %v1211, 0
  %v1241 = vsel %vm342, %v1212, 0
  %1243 = vmatprep.subr.mxu0 0.0
  %1244 = vmatpush1.msra.mxu0 %v1189
  %1245 = vmatprep.subr.mxu0 0.0
  %1246 = vmatpush1.msra.mxu0 %v1190
  %1247 = vmatprep.subr.mxu0 0.0
  %1248 = vmatpush1.msra.mxu0 %v1191
  %1249 = vmatprep.subr.mxu0 0.0
  %1250 = vmatpush1.msra.mxu0 %v1192
  %1251 = vmatprep.subr.mxu0 0.0
  %1252 = vmatpush1.msra.mxu0 0.0
  %1253 = vmatprep.subr.mxu0 0.0
  %1254 = vmatpush1.msra.mxu0 0.0
  %1255 = vmatprep.subr.mxu0 0.0
  %1256 = vmatpush1.msra.mxu0 0.0
  %1257 = vmatprep.subr.mxu0 0.0
  %1258 = vmatpush1.msra.mxu0 0.0
  %1259 = vmatprep.subr.mxu0 0.0
  %1260 = vmatpush1.msra.mxu0 0.0
  %1261 = vmatprep.subr.mxu0 0.0
  %1262 = vmatpush1.msra.mxu0 0.0
  %1263 = vmatprep.subr.mxu0 0.0
  %1264 = vmatpush1.msra.mxu0 0.0
  %1265 = vmatprep.subr.mxu0 0.0
  %1266 = vmatpush1.msra.mxu0 0.0
  %1267 = vmatprep.subr.mxu0 0.0
  %1268 = vmatpush1.msra.mxu0 0.0
  %1269 = vmatprep.subr.mxu0 0.0
  %1270 = vmatpush1.msra.mxu0 0.0
  %1271 = vmatprep.subr.mxu0 0.0
  %1272 = vmatpush1.msra.mxu0 0.0
  %1273 = vmatprep.subr.mxu0 0.0
  %1274 = vmatpush1.msra.mxu0 0.0
  %1275 = vmatprep.subr.mxu0 0.0
  %1276 = vmatpush1.msra.mxu0 0.0
  %1277 = vmatprep.subr.mxu0 0.0
  %1278 = vmatpush1.msra.mxu0 0.0
  %1279 = vmatprep.subr.mxu0 0.0
  %1280 = vmatpush1.msra.mxu0 0.0
  %1281 = vmatprep.subr.mxu0 0.0
  %1282 = vmatpush1.msra.mxu0 0.0
  %1283 = vmatprep.subr.mxu0 0.0
  %1284 = vmatpush1.msra.mxu0 0.0
  %1285 = vmatprep.subr.mxu0 0.0
  %1286 = vmatpush1.msra.mxu0 0.0
  %1287 = vmatprep.subr.mxu0 0.0
  %1288 = vmatpush1.msra.mxu0 0.0
  %1289 = vmatprep.subr.mxu0 0.0
  %1290 = vmatpush1.msra.mxu0 0.0
  %1291 = vmatprep.subr.mxu0 0.0
  %1292 = vmatpush1.msra.mxu0 0.0
  %1293 = vmatprep.subr.mxu0 0.0
  %1294 = vmatpush1.msra.mxu0 0.0
  %1295 = vmatprep.subr.mxu0 0.0
  %1296 = vmatpush1.msra.mxu0 0.0
  %1297 = vmatprep.subr.mxu0 0.0
  %1298 = vmatpush1.msra.mxu0 0.0
  %1299 = vmatprep.subr.mxu0 0.0
  %1300 = vmatpush1.msra.mxu0 0.0
  %1301 = vmatprep.subr.mxu0 0.0
  %1302 = vmatpush1.msra.mxu0 0.0
  %1303 = vmatprep.subr.mxu0 0.0
  %1304 = vmatpush1.msra.mxu0 0.0
  %1305 = vmatprep.subr.mxu0 0.0
  %1306 = vmatpush1.msra.mxu0 0.0
  %1307 = vmatprep.mubr.f32.mxu0 0.0
  %1308 = vmatmul.mubr.f32.gmra.mrb[0].mxu0 %v1220
  %v1309 = vpop.f32.mrb[0].mxu0
  %v1310 = vadd.f32 %v1217, %v1309
  %v1311 = vpop.f32.mrb[0].mxu0
  %1312 = vmatprep.mubr.f32.mxu0 0.0
  %1313 = vmatmul.mubr.f32.gmra.mrb[0].mxu0 %v1223
  %v1314 = vpop.f32.mrb[0].mxu0
  %v1315 = vadd.f32 %v1217, %v1314
  %v1316 = vpop.f32.mrb[0].mxu0
  %1317 = vmatprep.mubr.f32.mxu0 0.0
  %1318 = vmatmul.mubr.f32.gmra.mrb[0].mxu0 %v1226
  %v1319 = vpop.f32.mrb[0].mxu0
  %v1320 = vadd.f32 %v1217, %v1319
  %v1321 = vpop.f32.mrb[0].mxu0
  %1322 = vmatprep.mubr.f32.mxu0 0.0
  %1323 = vmatmul.mubr.f32.gmra.mrb[0].mxu0 %v1229
  %v1324 = vpop.f32.mrb[0].mxu0
  %v1325 = vadd.f32 %v1217, %v1324
  %v1326 = vpop.f32.mrb[0].mxu0
  %1327 = vmatprep.mubr.f32.mxu0 0.0
  %1328 = vmatmul.mubr.f32.gmra.mrb[0].mxu0 %v1232
  %v1329 = vpop.f32.mrb[0].mxu0
  %v1330 = vadd.f32 %v1217, %v1329
  %v1331 = vpop.f32.mrb[0].mxu0
  %1332 = vmatprep.mubr.f32.mxu0 0.0
  %1333 = vmatmul.mubr.f32.gmra.mrb[0].mxu0 %v1235
  %v1334 = vpop.f32.mrb[0].mxu0
  %v1335 = vadd.f32 %v1217, %v1334
  %v1336 = vpop.f32.mrb[0].mxu0
  %1337 = vmatprep.mubr.f32.mxu0 0.0
  %1338 = vmatmul.mubr.f32.gmra.mrb[0].mxu0 %v1238
  %v1339 = vpop.f32.mrb[0].mxu0
  %v1340 = vadd.f32 %v1217, %v1339
  %v1341 = vpop.f32.mrb[0].mxu0
  %1342 = vmatprep.mubr.f32.mxu0 0.0
  %1343 = vmatmul.mubr.f32.gmra.mrb[0].mxu0 %v1241
  %v1344 = vpop.f32.mrb[0].mxu0
  %v1345 = vadd.f32 %v1217, %v1344
  %v1346 = vpop.f32.mrb[0].mxu0
  %1347 = vdwg.mxu0
  %1348 = vst.msk [vmem:[#allocation2] sm:$0xff] %vm332, %v1310
  %1349 = vst.msk [vmem:[#allocation2 + $0x8] sm:$0xff] %vm332, %v1315
  %1350 = vst.msk [vmem:[#allocation2 + $0x10] sm:$0xff] %vm332, %v1320
  %1351 = vst.msk [vmem:[#allocation2 + $0x18] sm:$0xff] %vm332, %v1325
  %1352 = vst.msk [vmem:[#allocation2 + $0x20] sm:$0xff] %vm332, %v1330
  %1353 = vst.msk [vmem:[#allocation2 + $0x28] sm:$0xff] %vm332, %v1335
  %1354 = vst.msk [vmem:[#allocation2 + $0x30] sm:$0xff] %vm332, %v1340
  %1355 = vst.msk [vmem:[#allocation2 + $0x38] sm:$0xff] %vm332, %v1345
  %v1356 = vld [vmem:[#allocation2] sm:$0xff]
  %1357 = vmatprep.subr.mxu0 0.0
  %1358 = vmatpush1.msra.mxu0 %v1193
  %1359 = vmatprep.subr.mxu0 0.0
  %1360 = vmatpush1.msra.mxu0 %v1194
  %1361 = vmatprep.subr.mxu0 0.0
  %1362 = vmatpush1.msra.mxu0 %v1195
  %1363 = vmatprep.subr.mxu0 0.0
  %1364 = vmatpush1.msra.mxu0 %v1196
  %1365 = vmatprep.subr.mxu0 0.0
  %1366 = vmatpush1.msra.mxu0 0.0
  %1367 = vmatprep.subr.mxu0 0.0
  %1368 = vmatpush1.msra.mxu0 0.0
  %1369 = vmatprep.subr.mxu0 0.0
  %1370 = vmatpush1.msra.mxu0 0.0
  %1371 = vmatprep.subr.mxu0 0.0
  %1372 = vmatpush1.msra.mxu0 0.0
  %1373 = vmatprep.subr.mxu0 0.0
  %1374 = vmatpush1.msra.mxu0 0.0
  %1375 = vmatprep.subr.mxu0 0.0
  %1376 = vmatpush1.msra.mxu0 0.0
  %1377 = vmatprep.subr.mxu0 0.0
  %1378 = vmatpush1.msra.mxu0 0.0
  %1379 = vmatprep.subr.mxu0 0.0
  %1380 = vmatpush1.msra.mxu0 0.0
  %1381 = vmatprep.subr.mxu0 0.0
  %1382 = vmatpush1.msra.mxu0 0.0
  %1383 = vmatprep.subr.mxu0 0.0
  %1384 = vmatpush1.msra.mxu0 0.0
  %1385 = vmatprep.subr.mxu0 0.0
  %1386 = vmatpush1.msra.mxu0 0.0
  %1387 = vmatprep.subr.mxu0 0.0
  %1388 = vmatpush1.msra.mxu0 0.0
  %1389 = vmatprep.subr.mxu0 0.0
  %1390 = vmatpush1.msra.mxu0 0.0
  %1391 = vmatprep.subr.mxu0 0.0
  %1392 = vmatpush1.msra.mxu0 0.0
  %1393 = vmatprep.subr.mxu0 0.0
  %1394 = vmatpush1.msra.mxu0 0.0
  %1395 = vmatprep.subr.mxu0 0.0
  %1396 = vmatpush1.msra.mxu0 0.0
  %1397 = vmatprep.subr.mxu0 0.0
  %1398 = vmatpush1.msra.mxu0 0.0
  %1399 = vmatprep.subr.mxu0 0.0
  %1400 = vmatpush1.msra.mxu0 0.0
  %1401 = vmatprep.subr.mxu0 0.0
  %1402 = vmatpush1.msra.mxu0 0.0
  %1403 = vmatprep.subr.mxu0 0.0
  %1404 = vmatpush1.msra.mxu0 0.0
  %1405 = vmatprep.subr.mxu0 0.0
  %1406 = vmatpush1.msra.mxu0 0.0
  %1407 = vmatprep.subr.mxu0 0.0
  %1408 = vmatpush1.msra.mxu0 0.0
  %1409 = vmatprep.subr.mxu0 0.0
  %1410 = vmatpush1.msra.mxu0 0.0
  %1411 = vmatprep.subr.mxu0 0.0
  %1412 = vmatpush1.msra.mxu0 0.0
  %1413 = vmatprep.subr.mxu0 0.0
  %1414 = vmatpush1.msra.mxu0 0.0
  %1415 = vmatprep.subr.mxu0 0.0
  %1416 = vmatpush1.msra.mxu0 0.0
  %1417 = vmatprep.subr.mxu0 0.0
  %1418 = vmatpush1.msra.mxu0 0.0
  %1419 = vmatprep.subr.mxu0 0.0
  %1420 = vmatpush1.msra.mxu0 0.0
  %1421 = vmatprep.mubr.f32.mxu0 0.0
  %1422 = vmatmul.mubr.f32.gmra.mrb[0].mxu0 %v344
  %v1423 = vpop.f32.mrb[0].mxu0
  %v1424 = vadd.f32 %v1203, %v1423
  %v1425 = vpop.f32.mrb[0].mxu0
  %1426 = vdwg.mxu0
  %v1427 = vadd.f32 %v1356, %v1424
  %v1428 = vxor.u32 %v1427, 2147483648
  %v1429 = vmul.f32 %v1428, 1.442695
  %v1430 = vpow.pop %v1429
  %v1431 = vadd.f32 %v1430, 1.0
  %v1432 = vrcp.pop %v1431
  %v1433 = vmul.f32 1.0, %v1432
  %1435 = vrot.lane.b32.xlu0 %v1424, 64
  %v1436 = vpop.permute.xlu0 %1435
  %v1438 = vmul.f32 %v1433, %v1436
  %1440 = vrot.lane.b32.xlu0 %v1438, 64
  %v1441 = vpop.permute.xlu0 %1440
  %v1443 = vadd.f32 %v1356, %v1441
  %v1444 = vtanh.pop %v1443
  %v1445 = vsub.f32 1.0, %v1433
  %1447 = vrot.lane.b32.xlu0 %v1444, 96
  %v1448 = vpop.permute.xlu0 %1447
  %v1450 = vmul.f32 %v1445, %v1448
  %v1451 = vmul.f32 %v1433, 0.0
  %v1452 = vadd.f32 %v1450, %v1451
  %1454 = vrot.lane.b32.xlu0 %v1452, 96
  %v1455 = vpop.permute.xlu0 %1454
  %1457 = vst.msk [vmem:[%s9] sm:$0xff] %vm342, %v1455
  %v1458 = vld [vmem:[%s447] sm:$0xff]
  %v1459 = vsel %vm342, %v1455, 0
  %1461 = vmatprep.subr.mxu0 0.0
  %1462 = vmatpush1.msra.mxu0 %v1193
  %1463 = vmatprep.subr.mxu0 0.0
  %1464 = vmatpush1.msra.mxu0 %v1194
  %1465 = vmatprep.subr.mxu0 0.0
  %1466 = vmatpush1.msra.mxu0 %v1195
  %1467 = vmatprep.subr.mxu0 0.0
  %1468 = vmatpush1.msra.mxu0 %v1196
  %1469 = vmatprep.subr.mxu0 0.0
  %1470 = vmatpush1.msra.mxu0 0.0
  %1471 = vmatprep.subr.mxu0 0.0
  %1472 = vmatpush1.msra.mxu0 0.0
  %1473 = vmatprep.subr.mxu0 0.0
  %1474 = vmatpush1.msra.mxu0 0.0
  %1475 = vmatprep.subr.mxu0 0.0
  %1476 = vmatpush1.msra.mxu0 0.0
  %1477 = vmatprep.subr.mxu0 0.0
  %1478 = vmatpush1.msra.mxu0 0.0
  %1479 = vmatprep.subr.mxu0 0.0
  %1480 = vmatpush1.msra.mxu0 0.0
  %1481 = vmatprep.subr.mxu0 0.0
  %1482 = vmatpush1.msra.mxu0 0.0
  %1483 = vmatprep.subr.mxu0 0.0
  %1484 = vmatpush1.msra.mxu0 0.0
  %1485 = vmatprep.subr.mxu0 0.0
  %1486 = vmatpush1.msra.mxu0 0.0
  %1487 = vmatprep.subr.mxu0 0.0
  %1488 = vmatpush1.msra.mxu0 0.0
  %1489 = vmatprep.subr.mxu0 0.0
  %1490 = vmatpush1.msra.mxu0 0.0
  %1491 = vmatprep.subr.mxu0 0.0
  %1492 = vmatpush1.msra.mxu0 0.0
  %1493 = vmatprep.subr.mxu0 0.0
  %1494 = vmatpush1.msra.mxu0 0.0
  %1495 = vmatprep.subr.mxu0 0.0
  %1496 = vmatpush1.msra.mxu0 0.0
  %1497 = vmatprep.subr.mxu0 0.0
  %1498 = vmatpush1.msra.mxu0 0.0
  %1499 = vmatprep.subr.mxu0 0.0
  %1500 = vmatpush1.msra.mxu0 0.0
  %1501 = vmatprep.subr.mxu0 0.0
  %1502 = vmatpush1.msra.mxu0 0.0
  %1503 = vmatprep.subr.mxu0 0.0
  %1504 = vmatpush1.msra.mxu0 0.0
  %1505 = vmatprep.subr.mxu0 0.0
  %1506 = vmatpush1.msra.mxu0 0.0
  %1507 = vmatprep.subr.mxu0 0.0
  %1508 = vmatpush1.msra.mxu0 0.0
  %1509 = vmatprep.subr.mxu0 0.0
  %1510 = vmatpush1.msra.mxu0 0.0
  %1511 = vmatprep.subr.mxu0 0.0
  %1512 = vmatpush1.msra.mxu0 0.0
  %1513 = vmatprep.subr.mxu0 0.0
  %1514 = vmatpush1.msra.mxu0 0.0
  %1515 = vmatprep.subr.mxu0 0.0
  %1516 = vmatpush1.msra.mxu0 0.0
  %1517 = vmatprep.subr.mxu0 0.0
  %1518 = vmatpush1.msra.mxu0 0.0
  %1519 = vmatprep.subr.mxu0 0.0
  %1520 = vmatpush1.msra.mxu0 0.0
  %1521 = vmatprep.subr.mxu0 0.0
  %1522 = vmatpush1.msra.mxu0 0.0
  %1523 = vmatprep.subr.mxu0 0.0
  %1524 = vmatpush1.msra.mxu0 0.0
  %1525 = vmatprep.mubr.f32.mxu0 0.0
  %1526 = vmatmul.mubr.f32.gmra.mrb[0].mxu0 %v1459
  %v1527 = vpop.f32.mrb[0].mxu0
  %v1528 = vadd.f32 %v1203, %v1527
  %v1529 = vpop.f32.mrb[0].mxu0
  %1530 = vdwg.mxu0
  %v1531 = vadd.f32 %v1458, %v1528
  %v1532 = vxor.u32 %v1531, 2147483648
  %v1533 = vmul.f32 %v1532, 1.442695
  %v1534 = vpow.pop %v1533
  %v1535 = vadd.f32 %v1534, 1.0
  %v1536 = vrcp.pop %v1535
  %v1537 = vmul.f32 1.0, %v1536
  %1539 = vrot.lane.b32.xlu0 %v1528, 64
  %v1540 = vpop.permute.xlu0 %1539
  %v1542 = vmul.f32 %v1537, %v1540
  %1544 = vrot.lane.b32.xlu0 %v1542, 64
  %v1545 = vpop.permute.xlu0 %1544
  %v1547 = vadd.f32 %v1458, %v1545
  %v1548 = vtanh.pop %v1547
  %v1549 = vsub.f32 1.0, %v1537
  %1551 = vrot.lane.b32.xlu0 %v1548, 96
  %v1552 = vpop.permute.xlu0 %1551
  %v1554 = vmul.f32 %v1549, %v1552
  %v1555 = vmul.f32 %v1537, %v1452
  %v1556 = vadd.f32 %v1554, %v1555
  %1558 = vrot.lane.b32.xlu0 %v1556, 96
  %v1559 = vpop.permute.xlu0 %1558
  %s1561 = scalar_lea.vmem %s9, 8
  %1562 = vst.msk [vmem:[%s1561] sm:$0xff] %vm342, %v1559
  %v1563 = vld [vmem:[%s553] sm:$0xff]
  %v1564 = vsel %vm342, %v1559, 0
  %1566 = vmatprep.subr.mxu0 0.0
  %1567 = vmatpush1.msra.mxu0 %v1193
  %1568 = vmatprep.subr.mxu0 0.0
  %1569 = vmatpush1.msra.mxu0 %v1194
  %1570 = vmatprep.subr.mxu0 0.0
  %1571 = vmatpush1.msra.mxu0 %v1195
  %1572 = vmatprep.subr.mxu0 0.0
  %1573 = vmatpush1.msra.mxu0 %v1196
  %1574 = vmatprep.subr.mxu0 0.0
  %1575 = vmatpush1.msra.mxu0 0.0
  %1576 = vmatprep.subr.mxu0 0.0
  %1577 = vmatpush1.msra.mxu0 0.0
  %1578 = vmatprep.subr.mxu0 0.0
  %1579 = vmatpush1.msra.mxu0 0.0
  %1580 = vmatprep.subr.mxu0 0.0
  %1581 = vmatpush1.msra.mxu0 0.0
  %1582 = vmatprep.subr.mxu0 0.0
  %1583 = vmatpush1.msra.mxu0 0.0
  %1584 = vmatprep.subr.mxu0 0.0
  %1585 = vmatpush1.msra.mxu0 0.0
  %1586 = vmatprep.subr.mxu0 0.0
  %1587 = vmatpush1.msra.mxu0 0.0
  %1588 = vmatprep.subr.mxu0 0.0
  %1589 = vmatpush1.msra.mxu0 0.0
  %1590 = vmatprep.subr.mxu0 0.0
  %1591 = vmatpush1.msra.mxu0 0.0
  %1592 = vmatprep.subr.mxu0 0.0
  %1593 = vmatpush1.msra.mxu0 0.0
  %1594 = vmatprep.subr.mxu0 0.0
  %1595 = vmatpush1.msra.mxu0 0.0
  %1596 = vmatprep.subr.mxu0 0.0
  %1597 = vmatpush1.msra.mxu0 0.0
  %1598 = vmatprep.subr.mxu0 0.0
  %1599 = vmatpush1.msra.mxu0 0.0
  %1600 = vmatprep.subr.mxu0 0.0
  %1601 = vmatpush1.msra.mxu0 0.0
  %1602 = vmatprep.subr.mxu0 0.0
  %1603 = vmatpush1.msra.mxu0 0.0
  %1604 = vmatprep.subr.mxu0 0.0
  %1605 = vmatpush1.msra.mxu0 0.0
  %1606 = vmatprep.subr.mxu0 0.0
  %1607 = vmatpush1.msra.mxu0 0.0
  %1608 = vmatprep.subr.mxu0 0.0
  %1609 = vmatpush1.msra.mxu0 0.0
  %1610 = vmatprep.subr.mxu0 0.0
  %1611 = vmatpush1.msra.mxu0 0.0
  %1612 = vmatprep.subr.mxu0 0.0
  %1613 = vmatpush1.msra.mxu0 0.0
  %1614 = vmatprep.subr.mxu0 0.0
  %1615 = vmatpush1.msra.mxu0 0.0
  %1616 = vmatprep.subr.mxu0 0.0
  %1617 = vmatpush1.msra.mxu0 0.0
  %1618 = vmatprep.subr.mxu0 0.0
  %1619 = vmatpush1.msra.mxu0 0.0
  %1620 = vmatprep.subr.mxu0 0.0
  %1621 = vmatpush1.msra.mxu0 0.0
  %1622 = vmatprep.subr.mxu0 0.0
  %1623 = vmatpush1.msra.mxu0 0.0
  %1624 = vmatprep.subr.mxu0 0.0
  %1625 = vmatpush1.msra.mxu0 0.0
  %1626 = vmatprep.subr.mxu0 0.0
  %1627 = vmatpush1.msra.mxu0 0.0
  %1628 = vmatprep.subr.mxu0 0.0
  %1629 = vmatpush1.msra.mxu0 0.0
  %1630 = vmatprep.mubr.f32.mxu0 0.0
  %1631 = vmatmul.mubr.f32.gmra.mrb[0].mxu0 %v1564
  %v1632 = vpop.f32.mrb[0].mxu0
  %v1633 = vadd.f32 %v1203, %v1632
  %v1634 = vpop.f32.mrb[0].mxu0
  %1635 = vdwg.mxu0
  %v1636 = vadd.f32 %v1563, %v1633
  %v1637 = vxor.u32 %v1636, 2147483648
  %v1638 = vmul.f32 %v1637, 1.442695
  %v1639 = vpow.pop %v1638
  %v1640 = vadd.f32 %v1639, 1.0
  %v1641 = vrcp.pop %v1640
  %v1642 = vmul.f32 1.0, %v1641
  %1644 = vrot.lane.b32.xlu0 %v1633, 64
  %v1645 = vpop.permute.xlu0 %1644
  %v1647 = vmul.f32 %v1642, %v1645
  %1649 = vrot.lane.b32.xlu0 %v1647, 64
  %v1650 = vpop.permute.xlu0 %1649
  %v1652 = vadd.f32 %v1563, %v1650
  %v1653 = vtanh.pop %v1652
  %v1654 = vsub.f32 1.0, %v1642
  %1656 = vrot.lane.b32.xlu0 %v1653, 96
  %v1657 = vpop.permute.xlu0 %1656
  %v1659 = vmul.f32 %v1654, %v1657
  %v1660 = vmul.f32 %v1642, %v1556
  %v1661 = vadd.f32 %v1659, %v1660
  %1663 = vrot.lane.b32.xlu0 %v1661, 96
  %v1664 = vpop.permute.xlu0 %1663
  %s1666 = scalar_lea.vmem %s9, 16
  %1667 = vst.msk [vmem:[%s1666] sm:$0xff] %vm342, %v1664
  %v1668 = vld [vmem:[%s659] sm:$0xff]
  %v1669 = vsel %vm342, %v1664, 0
  %1671 = vmatprep.subr.mxu0 0.0
  %1672 = vmatpush1.msra.mxu0 %v1193
  %1673 = vmatprep.subr.mxu0 0.0
  %1674 = vmatpush1.msra.mxu0 %v1194
  %1675 = vmatprep.subr.mxu0 0.0
  %1676 = vmatpush1.msra.mxu0 %v1195
  %1677 = vmatprep.subr.mxu0 0.0
  %1678 = vmatpush1.msra.mxu0 %v1196
  %1679 = vmatprep.subr.mxu0 0.0
  %1680 = vmatpush1.msra.mxu0 0.0
  %1681 = vmatprep.subr.mxu0 0.0
  %1682 = vmatpush1.msra.mxu0 0.0
  %1683 = vmatprep.subr.mxu0 0.0
  %1684 = vmatpush1.msra.mxu0 0.0
  %1685 = vmatprep.subr.mxu0 0.0
  %1686 = vmatpush1.msra.mxu0 0.0
  %1687 = vmatprep.subr.mxu0 0.0
  %1688 = vmatpush1.msra.mxu0 0.0
  %1689 = vmatprep.subr.mxu0 0.0
  %1690 = vmatpush1.msra.mxu0 0.0
  %1691 = vmatprep.subr.mxu0 0.0
  %1692 = vmatpush1.msra.mxu0 0.0
  %1693 = vmatprep.subr.mxu0 0.0
  %1694 = vmatpush1.msra.mxu0 0.0
  %1695 = vmatprep.subr.mxu0 0.0
  %1696 = vmatpush1.msra.mxu0 0.0
  %1697 = vmatprep.subr.mxu0 0.0
  %1698 = vmatpush1.msra.mxu0 0.0
  %1699 = vmatprep.subr.mxu0 0.0
  %1700 = vmatpush1.msra.mxu0 0.0
  %1701 = vmatprep.subr.mxu0 0.0
  %1702 = vmatpush1.msra.mxu0 0.0
  %1703 = vmatprep.subr.mxu0 0.0
  %1704 = vmatpush1.msra.mxu0 0.0
  %1705 = vmatprep.subr.mxu0 0.0
  %1706 = vmatpush1.msra.mxu0 0.0
  %1707 = vmatprep.subr.mxu0 0.0
  %1708 = vmatpush1.msra.mxu0 0.0
  %1709 = vmatprep.subr.mxu0 0.0
  %1710 = vmatpush1.msra.mxu0 0.0
  %1711 = vmatprep.subr.mxu0 0.0
  %1712 = vmatpush1.msra.mxu0 0.0
  %1713 = vmatprep.subr.mxu0 0.0
  %1714 = vmatpush1.msra.mxu0 0.0
  %1715 = vmatprep.subr.mxu0 0.0
  %1716 = vmatpush1.msra.mxu0 0.0
  %1717 = vmatprep.subr.mxu0 0.0
  %1718 = vmatpush1.msra.mxu0 0.0
  %1719 = vmatprep.subr.mxu0 0.0
  %1720 = vmatpush1.msra.mxu0 0.0
  %1721 = vmatprep.subr.mxu0 0.0
  %1722 = vmatpush1.msra.mxu0 0.0
  %1723 = vmatprep.subr.mxu0 0.0
  %1724 = vmatpush1.msra.mxu0 0.0
  %1725 = vmatprep.subr.mxu0 0.0
  %1726 = vmatpush1.msra.mxu0 0.0
  %1727 = vmatprep.subr.mxu0 0.0
  %1728 = vmatpush1.msra.mxu0 0.0
  %1729 = vmatprep.subr.mxu0 0.0
  %1730 = vmatpush1.msra.mxu0 0.0
  %1731 = vmatprep.subr.mxu0 0.0
  %1732 = vmatpush1.msra.mxu0 0.0
  %1733 = vmatprep.subr.mxu0 0.0
  %1734 = vmatpush1.msra.mxu0 0.0
  %1735 = vmatprep.mubr.f32.mxu0 0.0
  %1736 = vmatmul.mubr.f32.gmra.mrb[0].mxu0 %v1669
  %v1737 = vpop.f32.mrb[0].mxu0
  %v1738 = vadd.f32 %v1203, %v1737
  %v1739 = vpop.f32.mrb[0].mxu0
  %1740 = vdwg.mxu0
  %v1741 = vadd.f32 %v1668, %v1738
  %v1742 = vxor.u32 %v1741, 2147483648
  %v1743 = vmul.f32 %v1742, 1.442695
  %v1744 = vpow.pop %v1743
  %v1745 = vadd.f32 %v1744, 1.0
  %v1746 = vrcp.pop %v1745
  %v1747 = vmul.f32 1.0, %v1746
  %1749 = vrot.lane.b32.xlu0 %v1738, 64
  %v1750 = vpop.permute.xlu0 %1749
  %v1752 = vmul.f32 %v1747, %v1750
  %1754 = vrot.lane.b32.xlu0 %v1752, 64
  %v1755 = vpop.permute.xlu0 %1754
  %v1757 = vadd.f32 %v1668, %v1755
  %v1758 = vtanh.pop %v1757
  %v1759 = vsub.f32 1.0, %v1747
  %1761 = vrot.lane.b32.xlu0 %v1758, 96
  %v1762 = vpop.permute.xlu0 %1761
  %v1764 = vmul.f32 %v1759, %v1762
  %v1765 = vmul.f32 %v1747, %v1661
  %v1766 = vadd.f32 %v1764, %v1765
  %1768 = vrot.lane.b32.xlu0 %v1766, 96
  %v1769 = vpop.permute.xlu0 %1768
  %s1771 = scalar_lea.vmem %s9, 24
  %1772 = vst.msk [vmem:[%s1771] sm:$0xff] %vm342, %v1769
  %v1773 = vld [vmem:[%s765] sm:$0xff]
  %v1774 = vsel %vm342, %v1769, 0
  %1776 = vmatprep.subr.mxu0 0.0
  %1777 = vmatpush1.msra.mxu0 %v1193
  %1778 = vmatprep.subr.mxu0 0.0
  %1779 = vmatpush1.msra.mxu0 %v1194
  %1780 = vmatprep.subr.mxu0 0.0
  %1781 = vmatpush1.msra.mxu0 %v1195
  %1782 = vmatprep.subr.mxu0 0.0
  %1783 = vmatpush1.msra.mxu0 %v1196
  %1784 = vmatprep.subr.mxu0 0.0
  %1785 = vmatpush1.msra.mxu0 0.0
  %1786 = vmatprep.subr.mxu0 0.0
  %1787 = vmatpush1.msra.mxu0 0.0
  %1788 = vmatprep.subr.mxu0 0.0
  %1789 = vmatpush1.msra.mxu0 0.0
  %1790 = vmatprep.subr.mxu0 0.0
  %1791 = vmatpush1.msra.mxu0 0.0
  %1792 = vmatprep.subr.mxu0 0.0
  %1793 = vmatpush1.msra.mxu0 0.0
  %1794 = vmatprep.subr.mxu0 0.0
  %1795 = vmatpush1.msra.mxu0 0.0
  %1796 = vmatprep.subr.mxu0 0.0
  %1797 = vmatpush1.msra.mxu0 0.0
  %1798 = vmatprep.subr.mxu0 0.0
  %1799 = vmatpush1.msra.mxu0 0.0
  %1800 = vmatprep.subr.mxu0 0.0
  %1801 = vmatpush1.msra.mxu0 0.0
  %1802 = vmatprep.subr.mxu0 0.0
  %1803 = vmatpush1.msra.mxu0 0.0
  %1804 = vmatprep.subr.mxu0 0.0
  %1805 = vmatpush1.msra.mxu0 0.0
  %1806 = vmatprep.subr.mxu0 0.0
  %1807 = vmatpush1.msra.mxu0 0.0
  %1808 = vmatprep.subr.mxu0 0.0
  %1809 = vmatpush1.msra.mxu0 0.0
  %1810 = vmatprep.subr.mxu0 0.0
  %1811 = vmatpush1.msra.mxu0 0.0
  %1812 = vmatprep.subr.mxu0 0.0
  %1813 = vmatpush1.msra.mxu0 0.0
  %1814 = vmatprep.subr.mxu0 0.0
  %1815 = vmatpush1.msra.mxu0 0.0
  %1816 = vmatprep.subr.mxu0 0.0
  %1817 = vmatpush1.msra.mxu0 0.0
  %1818 = vmatprep.subr.mxu0 0.0
  %1819 = vmatpush1.msra.mxu0 0.0
  %1820 = vmatprep.subr.mxu0 0.0
  %1821 = vmatpush1.msra.mxu0 0.0
  %1822 = vmatprep.subr.mxu0 0.0
  %1823 = vmatpush1.msra.mxu0 0.0
  %1824 = vmatprep.subr.mxu0 0.0
  %1825 = vmatpush1.msra.mxu0 0.0
  %1826 = vmatprep.subr.mxu0 0.0
  %1827 = vmatpush1.msra.mxu0 0.0
  %1828 = vmatprep.subr.mxu0 0.0
  %1829 = vmatpush1.msra.mxu0 0.0
  %1830 = vmatprep.subr.mxu0 0.0
  %1831 = vmatpush1.msra.mxu0 0.0
  %1832 = vmatprep.subr.mxu0 0.0
  %1833 = vmatpush1.msra.mxu0 0.0
  %1834 = vmatprep.subr.mxu0 0.0
  %1835 = vmatpush1.msra.mxu0 0.0
  %1836 = vmatprep.subr.mxu0 0.0
  %1837 = vmatpush1.msra.mxu0 0.0
  %1838 = vmatprep.subr.mxu0 0.0
  %1839 = vmatpush1.msra.mxu0 0.0
  %1840 = vmatprep.mubr.f32.mxu0 0.0
  %1841 = vmatmul.mubr.f32.gmra.mrb[0].mxu0 %v1774
  %v1842 = vpop.f32.mrb[0].mxu0
  %v1843 = vadd.f32 %v1203, %v1842
  %v1844 = vpop.f32.mrb[0].mxu0
  %1845 = vdwg.mxu0
  %v1846 = vadd.f32 %v1773, %v1843
  %v1847 = vxor.u32 %v1846, 2147483648
  %v1848 = vmul.f32 %v1847, 1.442695
  %v1849 = vpow.pop %v1848
  %v1850 = vadd.f32 %v1849, 1.0
  %v1851 = vrcp.pop %v1850
  %v1852 = vmul.f32 1.0, %v1851
  %1854 = vrot.lane.b32.xlu0 %v1843, 64
  %v1855 = vpop.permute.xlu0 %1854
  %v1857 = vmul.f32 %v1852, %v1855
  %1859 = vrot.lane.b32.xlu0 %v1857, 64
  %v1860 = vpop.permute.xlu0 %1859
  %v1862 = vadd.f32 %v1773, %v1860
  %v1863 = vtanh.pop %v1862
  %v1864 = vsub.f32 1.0, %v1852
  %1866 = vrot.lane.b32.xlu0 %v1863, 96
  %v1867 = vpop.permute.xlu0 %1866
  %v1869 = vmul.f32 %v1864, %v1867
  %v1870 = vmul.f32 %v1852, %v1766
  %v1871 = vadd.f32 %v1869, %v1870
  %1873 = vrot.lane.b32.xlu0 %v1871, 96
  %v1874 = vpop.permute.xlu0 %1873
  %s1876 = scalar_lea.vmem %s9, 32
  %1877 = vst.msk [vmem:[%s1876] sm:$0xff] %vm342, %v1874
  %v1878 = vld [vmem:[%s871] sm:$0xff]
  %v1879 = vsel %vm342, %v1874, 0
  %1881 = vmatprep.subr.mxu0 0.0
  %1882 = vmatpush1.msra.mxu0 %v1193
  %1883 = vmatprep.subr.mxu0 0.0
  %1884 = vmatpush1.msra.mxu0 %v1194
  %1885 = vmatprep.subr.mxu0 0.0
  %1886 = vmatpush1.msra.mxu0 %v1195
  %1887 = vmatprep.subr.mxu0 0.0
  %1888 = vmatpush1.msra.mxu0 %v1196
  %1889 = vmatprep.subr.mxu0 0.0
  %1890 = vmatpush1.msra.mxu0 0.0
  %1891 = vmatprep.subr.mxu0 0.0
  %1892 = vmatpush1.msra.mxu0 0.0
  %1893 = vmatprep.subr.mxu0 0.0
  %1894 = vmatpush1.msra.mxu0 0.0
  %1895 = vmatprep.subr.mxu0 0.0
  %1896 = vmatpush1.msra.mxu0 0.0
  %1897 = vmatprep.subr.mxu0 0.0
  %1898 = vmatpush1.msra.mxu0 0.0
  %1899 = vmatprep.subr.mxu0 0.0
  %1900 = vmatpush1.msra.mxu0 0.0
  %1901 = vmatprep.subr.mxu0 0.0
  %1902 = vmatpush1.msra.mxu0 0.0
  %1903 = vmatprep.subr.mxu0 0.0
  %1904 = vmatpush1.msra.mxu0 0.0
  %1905 = vmatprep.subr.mxu0 0.0
  %1906 = vmatpush1.msra.mxu0 0.0
  %1907 = vmatprep.subr.mxu0 0.0
  %1908 = vmatpush1.msra.mxu0 0.0
  %1909 = vmatprep.subr.mxu0 0.0
  %1910 = vmatpush1.msra.mxu0 0.0
  %1911 = vmatprep.subr.mxu0 0.0
  %1912 = vmatpush1.msra.mxu0 0.0
  %1913 = vmatprep.subr.mxu0 0.0
  %1914 = vmatpush1.msra.mxu0 0.0
  %1915 = vmatprep.subr.mxu0 0.0
  %1916 = vmatpush1.msra.mxu0 0.0
  %1917 = vmatprep.subr.mxu0 0.0
  %1918 = vmatpush1.msra.mxu0 0.0
  %1919 = vmatprep.subr.mxu0 0.0
  %1920 = vmatpush1.msra.mxu0 0.0
  %1921 = vmatprep.subr.mxu0 0.0
  %1922 = vmatpush1.msra.mxu0 0.0
  %1923 = vmatprep.subr.mxu0 0.0
  %1924 = vmatpush1.msra.mxu0 0.0
  %1925 = vmatprep.subr.mxu0 0.0
  %1926 = vmatpush1.msra.mxu0 0.0
  %1927 = vmatprep.subr.mxu0 0.0
  %1928 = vmatpush1.msra.mxu0 0.0
  %1929 = vmatprep.subr.mxu0 0.0
  %1930 = vmatpush1.msra.mxu0 0.0
  %1931 = vmatprep.subr.mxu0 0.0
  %1932 = vmatpush1.msra.mxu0 0.0
  %1933 = vmatprep.subr.mxu0 0.0
  %1934 = vmatpush1.msra.mxu0 0.0
  %1935 = vmatprep.subr.mxu0 0.0
  %1936 = vmatpush1.msra.mxu0 0.0
  %1937 = vmatprep.subr.mxu0 0.0
  %1938 = vmatpush1.msra.mxu0 0.0
  %1939 = vmatprep.subr.mxu0 0.0
  %1940 = vmatpush1.msra.mxu0 0.0
  %1941 = vmatprep.subr.mxu0 0.0
  %1942 = vmatpush1.msra.mxu0 0.0
  %1943 = vmatprep.subr.mxu0 0.0
  %1944 = vmatpush1.msra.mxu0 0.0
  %1945 = vmatprep.mubr.f32.mxu0 0.0
  %1946 = vmatmul.mubr.f32.gmra.mrb[0].mxu0 %v1879
  %v1947 = vpop.f32.mrb[0].mxu0
  %v1948 = vadd.f32 %v1203, %v1947
  %v1949 = vpop.f32.mrb[0].mxu0
  %1950 = vdwg.mxu0
  %v1951 = vadd.f32 %v1878, %v1948
  %v1952 = vxor.u32 %v1951, 2147483648
  %v1953 = vmul.f32 %v1952, 1.442695
  %v1954 = vpow.pop %v1953
  %v1955 = vadd.f32 %v1954, 1.0
  %v1956 = vrcp.pop %v1955
  %v1957 = vmul.f32 1.0, %v1956
  %1959 = vrot.lane.b32.xlu0 %v1948, 64
  %v1960 = vpop.permute.xlu0 %1959
  %v1962 = vmul.f32 %v1957, %v1960
  %1964 = vrot.lane.b32.xlu0 %v1962, 64
  %v1965 = vpop.permute.xlu0 %1964
  %v1967 = vadd.f32 %v1878, %v1965
  %v1968 = vtanh.pop %v1967
  %v1969 = vsub.f32 1.0, %v1957
  %1971 = vrot.lane.b32.xlu0 %v1968, 96
  %v1972 = vpop.permute.xlu0 %1971
  %v1974 = vmul.f32 %v1969, %v1972
  %v1975 = vmul.f32 %v1957, %v1871
  %v1976 = vadd.f32 %v1974, %v1975
  %1978 = vrot.lane.b32.xlu0 %v1976, 96
  %v1979 = vpop.permute.xlu0 %1978
  %s1981 = scalar_lea.vmem %s9, 40
  %1982 = vst.msk [vmem:[%s1981] sm:$0xff] %vm342, %v1979
  %v1983 = vld [vmem:[%s977] sm:$0xff]
  %v1984 = vsel %vm342, %v1979, 0
  %1986 = vmatprep.subr.mxu0 0.0
  %1987 = vmatpush1.msra.mxu0 %v1193
  %1988 = vmatprep.subr.mxu0 0.0
  %1989 = vmatpush1.msra.mxu0 %v1194
  %1990 = vmatprep.subr.mxu0 0.0
  %1991 = vmatpush1.msra.mxu0 %v1195
  %1992 = vmatprep.subr.mxu0 0.0
  %1993 = vmatpush1.msra.mxu0 %v1196
  %1994 = vmatprep.subr.mxu0 0.0
  %1995 = vmatpush1.msra.mxu0 0.0
  %1996 = vmatprep.subr.mxu0 0.0
  %1997 = vmatpush1.msra.mxu0 0.0
  %1998 = vmatprep.subr.mxu0 0.0
  %1999 = vmatpush1.msra.mxu0 0.0
  %2000 = vmatprep.subr.mxu0 0.0
  %2001 = vmatpush1.msra.mxu0 0.0
  %2002 = vmatprep.subr.mxu0 0.0
  %2003 = vmatpush1.msra.mxu0 0.0
  %2004 = vmatprep.subr.mxu0 0.0
  %2005 = vmatpush1.msra.mxu0 0.0
  %2006 = vmatprep.subr.mxu0 0.0
  %2007 = vmatpush1.msra.mxu0 0.0
  %2008 = vmatprep.subr.mxu0 0.0
  %2009 = vmatpush1.msra.mxu0 0.0
  %2010 = vmatprep.subr.mxu0 0.0
  %2011 = vmatpush1.msra.mxu0 0.0
  %2012 = vmatprep.subr.mxu0 0.0
  %2013 = vmatpush1.msra.mxu0 0.0
  %2014 = vmatprep.subr.mxu0 0.0
  %2015 = vmatpush1.msra.mxu0 0.0
  %2016 = vmatprep.subr.mxu0 0.0
  %2017 = vmatpush1.msra.mxu0 0.0
  %2018 = vmatprep.subr.mxu0 0.0
  %2019 = vmatpush1.msra.mxu0 0.0
  %2020 = vmatprep.subr.mxu0 0.0
  %2021 = vmatpush1.msra.mxu0 0.0
  %2022 = vmatprep.subr.mxu0 0.0
  %2023 = vmatpush1.msra.mxu0 0.0
  %2024 = vmatprep.subr.mxu0 0.0
  %2025 = vmatpush1.msra.mxu0 0.0
  %2026 = vmatprep.subr.mxu0 0.0
  %2027 = vmatpush1.msra.mxu0 0.0
  %2028 = vmatprep.subr.mxu0 0.0
  %2029 = vmatpush1.msra.mxu0 0.0
  %2030 = vmatprep.subr.mxu0 0.0
  %2031 = vmatpush1.msra.mxu0 0.0
  %2032 = vmatprep.subr.mxu0 0.0
  %2033 = vmatpush1.msra.mxu0 0.0
  %2034 = vmatprep.subr.mxu0 0.0
  %2035 = vmatpush1.msra.mxu0 0.0
  %2036 = vmatprep.subr.mxu0 0.0
  %2037 = vmatpush1.msra.mxu0 0.0
  %2038 = vmatprep.subr.mxu0 0.0
  %2039 = vmatpush1.msra.mxu0 0.0
  %2040 = vmatprep.subr.mxu0 0.0
  %2041 = vmatpush1.msra.mxu0 0.0
  %2042 = vmatprep.subr.mxu0 0.0
  %2043 = vmatpush1.msra.mxu0 0.0
  %2044 = vmatprep.subr.mxu0 0.0
  %2045 = vmatpush1.msra.mxu0 0.0
  %2046 = vmatprep.subr.mxu0 0.0
  %2047 = vmatpush1.msra.mxu0 0.0
  %2048 = vmatprep.subr.mxu0 0.0
  %2049 = vmatpush1.msra.mxu0 0.0
  %2050 = vmatprep.mubr.f32.mxu0 0.0
  %2051 = vmatmul.mubr.f32.gmra.mrb[0].mxu0 %v1984
  %v2052 = vpop.f32.mrb[0].mxu0
  %v2053 = vadd.f32 %v1203, %v2052
  %v2054 = vpop.f32.mrb[0].mxu0
  %2055 = vdwg.mxu0
  %v2056 = vadd.f32 %v1983, %v2053
  %v2057 = vxor.u32 %v2056, 2147483648
  %v2058 = vmul.f32 %v2057, 1.442695
  %v2059 = vpow.pop %v2058
  %v2060 = vadd.f32 %v2059, 1.0
  %v2061 = vrcp.pop %v2060
  %v2062 = vmul.f32 1.0, %v2061
  %2064 = vrot.lane.b32.xlu0 %v2053, 64
  %v2065 = vpop.permute.xlu0 %2064
  %v2067 = vmul.f32 %v2062, %v2065
  %2069 = vrot.lane.b32.xlu0 %v2067, 64
  %v2070 = vpop.permute.xlu0 %2069
  %v2072 = vadd.f32 %v1983, %v2070
  %v2073 = vtanh.pop %v2072
  %v2074 = vsub.f32 1.0, %v2062
  %2076 = vrot.lane.b32.xlu0 %v2073, 96
  %v2077 = vpop.permute.xlu0 %2076
  %v2079 = vmul.f32 %v2074, %v2077
  %v2080 = vmul.f32 %v2062, %v1976
  %v2081 = vadd.f32 %v2079, %v2080
  %2083 = vrot.lane.b32.xlu0 %v2081, 96
  %v2084 = vpop.permute.xlu0 %2083
  %s2086 = scalar_lea.vmem %s9, 48
  %2087 = vst.msk [vmem:[%s2086] sm:$0xff] %vm342, %v2084
  %v2088 = vld [vmem:[%s1083] sm:$0xff]
  %v2089 = vsel %vm342, %v2084, 0
  %2091 = vmatprep.subr.mxu0 0.0
  %2092 = vmatpush1.msra.mxu0 %v1193
  %2093 = vmatprep.subr.mxu0 0.0
  %2094 = vmatpush1.msra.mxu0 %v1194
  %2095 = vmatprep.subr.mxu0 0.0
  %2096 = vmatpush1.msra.mxu0 %v1195
  %2097 = vmatprep.subr.mxu0 0.0
  %2098 = vmatpush1.msra.mxu0 %v1196
  %2099 = vmatprep.subr.mxu0 0.0
  %2100 = vmatpush1.msra.mxu0 0.0
  %2101 = vmatprep.subr.mxu0 0.0
  %2102 = vmatpush1.msra.mxu0 0.0
  %2103 = vmatprep.subr.mxu0 0.0
  %2104 = vmatpush1.msra.mxu0 0.0
  %2105 = vmatprep.subr.mxu0 0.0
  %2106 = vmatpush1.msra.mxu0 0.0
  %2107 = vmatprep.subr.mxu0 0.0
  %2108 = vmatpush1.msra.mxu0 0.0
  %2109 = vmatprep.subr.mxu0 0.0
  %2110 = vmatpush1.msra.mxu0 0.0
  %2111 = vmatprep.subr.mxu0 0.0
  %2112 = vmatpush1.msra.mxu0 0.0
  %2113 = vmatprep.subr.mxu0 0.0
  %2114 = vmatpush1.msra.mxu0 0.0
  %2115 = vmatprep.subr.mxu0 0.0
  %2116 = vmatpush1.msra.mxu0 0.0
  %2117 = vmatprep.subr.mxu0 0.0
  %2118 = vmatpush1.msra.mxu0 0.0
  %2119 = vmatprep.subr.mxu0 0.0
  %2120 = vmatpush1.msra.mxu0 0.0
  %2121 = vmatprep.subr.mxu0 0.0
  %2122 = vmatpush1.msra.mxu0 0.0
  %2123 = vmatprep.subr.mxu0 0.0
  %2124 = vmatpush1.msra.mxu0 0.0
  %2125 = vmatprep.subr.mxu0 0.0
  %2126 = vmatpush1.msra.mxu0 0.0
  %2127 = vmatprep.subr.mxu0 0.0
  %2128 = vmatpush1.msra.mxu0 0.0
  %2129 = vmatprep.subr.mxu0 0.0
  %2130 = vmatpush1.msra.mxu0 0.0
  %2131 = vmatprep.subr.mxu0 0.0
  %2132 = vmatpush1.msra.mxu0 0.0
  %2133 = vmatprep.subr.mxu0 0.0
  %2134 = vmatpush1.msra.mxu0 0.0
  %2135 = vmatprep.subr.mxu0 0.0
  %2136 = vmatpush1.msra.mxu0 0.0
  %2137 = vmatprep.subr.mxu0 0.0
  %2138 = vmatpush1.msra.mxu0 0.0
  %2139 = vmatprep.subr.mxu0 0.0
  %2140 = vmatpush1.msra.mxu0 0.0
  %2141 = vmatprep.subr.mxu0 0.0
  %2142 = vmatpush1.msra.mxu0 0.0
  %2143 = vmatprep.subr.mxu0 0.0
  %2144 = vmatpush1.msra.mxu0 0.0
  %2145 = vmatprep.subr.mxu0 0.0
  %2146 = vmatpush1.msra.mxu0 0.0
  %2147 = vmatprep.subr.mxu0 0.0
  %2148 = vmatpush1.msra.mxu0 0.0
  %2149 = vmatprep.subr.mxu0 0.0
  %2150 = vmatpush1.msra.mxu0 0.0
  %2151 = vmatprep.subr.mxu0 0.0
  %2152 = vmatpush1.msra.mxu0 0.0
  %2153 = vmatprep.subr.mxu0 0.0
  %2154 = vmatpush1.msra.mxu0 0.0
  %2155 = vmatprep.mubr.f32.mxu0 0.0
  %2156 = vmatmul.mubr.f32.gmra.mrb[0].mxu0 %v2089
  %v2157 = vpop.f32.mrb[0].mxu0
  %v2158 = vadd.f32 %v1203, %v2157
  %v2159 = vpop.f32.mrb[0].mxu0
  %2160 = vdwg.mxu0
  %v2161 = vadd.f32 %v2088, %v2158
  %v2162 = vxor.u32 %v2161, 2147483648
  %v2163 = vmul.f32 %v2162, 1.442695
  %v2164 = vpow.pop %v2163
  %v2165 = vadd.f32 %v2164, 1.0
  %v2166 = vrcp.pop %v2165
  %v2167 = vmul.f32 1.0, %v2166
  %2169 = vrot.lane.b32.xlu0 %v2158, 64
  %v2170 = vpop.permute.xlu0 %2169
  %v2172 = vmul.f32 %v2167, %v2170
  %2174 = vrot.lane.b32.xlu0 %v2172, 64
  %v2175 = vpop.permute.xlu0 %2174
  %v2177 = vadd.f32 %v2088, %v2175
  %v2178 = vtanh.pop %v2177
  %v2179 = vsub.f32 1.0, %v2167
  %2181 = vrot.lane.b32.xlu0 %v2178, 96
  %v2182 = vpop.permute.xlu0 %2181
  %v2184 = vmul.f32 %v2179, %v2182
  %v2185 = vmul.f32 %v2167, %v2081
  %v2186 = vadd.f32 %v2184, %v2185
  %2188 = vrot.lane.b32.xlu0 %v2186, 96
  %v2189 = vpop.permute.xlu0 %2188
  %s2191 = scalar_lea.vmem %s9, 56
  %2192 = vst.msk [vmem:[%s2191] sm:$0xff] %vm342, %v2189
  // Predicated region
  $region38: #{glove_gru_encoder.1} parent=0 // pred_check
    _
  $region39: #{glove_gru_encoder.1} parent=0 // pred_check_branch
    %2194 = sbr.rel (0) target = $region41
  $region40: #{glove_gru_encoder.1} parent=0 // pred_region
    _
  $region41: #{glove_gru_encoder.1} parent=0 // pred_fallthru
    _
  // Predicated region
  $region42: #{glove_gru_encoder.1} parent=0 // pred_check
    _
  $region43: #{glove_gru_encoder.1} parent=0 // pred_check_branch
    %2196 = sbr.rel (0) target = $region45
  $region44: #{glove_gru_encoder.1} parent=0 // pred_region
    _
  $region45: #{glove_gru_encoder.1} parent=0 // pred_fallthru
    _

</llo_original>
